<compile_context>
chip_gen: v7x
topology: tpu7x:2x2x1
jax: 0.10.0
libtpu: 0.0.40
codegen_flags: <defaults>
</compile_context>

<pallas_src>
import jax
import jax.numpy as jnp
from jax.experimental import pallas as pl
from jax.experimental.pallas import tpu as pltpu


BN_EPS = 1e-5
LAYER_DIMS = [1024, 512, 256, 128, 64]   # hidden widths fixed by the module

# ---- packed-vector slab layout (one f32 (24, 1024) array) ------------------
ROW_GAMMA = (0, 2, 4, 6, 8)     # BN gamma, layers 1..5
ROW_BETA = (1, 3, 5, 7, 9)      # BN beta,  layers 1..5
ROW_B6 = 10                     # final-layer bias
ROW_SCALE = (11, 12, 13, 14, 15, 16)   # per-output-channel int8 dequant scales
SLAB_ROWS = 24                  # padded to a sublane multiple
SLAB_WIDTH = 1024


# ---------------------------------------------------------------------------
# Fused kernel: the entire forward pass in one pallas_call.
# ---------------------------------------------------------------------------
def _fused_mlp_kernel(
    x_ref, slab_ref,
    w1_ref, w2_hbm, w3_hbm, w4_ref, w5_ref, w6_ref,
    o_ref,
    w2_buf, w3_buf, dma_sem,
):
    num_classes = o_ref.shape[1]

    # Kick off the DMAs for the two largest weights immediately so they overlap
    # with layer-1 / layer-2 compute (they live behind pl.ANY, not the prologue).
    cp2 = pltpu.make_async_copy(w2_hbm, w2_buf, dma_sem.at[0])
    cp3 = pltpu.make_async_copy(w3_hbm, w3_buf, dma_sem.at[1])
    cp2.start()
    cp3.start()

    def vec(row, n):
        # (1, n) f32 slice of the packed vector slab (static offsets).
        return slab_ref[row:row + 1, :n]

    def linear(h_f32, w_i8, layer):
        n = w_i8.shape[1]
        # int8 values are exactly representable in bf16; dequant scale is applied
        # to the (tiny) output instead of the (large) weight matrix.
        y = jnp.dot(
            h_f32.astype(jnp.bfloat16), w_i8.astype(jnp.bfloat16),
            preferred_element_type=jnp.float32,
        )
        return y * vec(ROW_SCALE[layer], n)

    def bn_relu(y, layer):
        # Training-mode BatchNorm1d: per-batch mean, biased variance, eps=1e-5,
        # folded into a single per-channel scale/shift.
        n = y.shape[1]
        mean = jnp.mean(y, axis=0, keepdims=True)
        var = jnp.mean((y - mean) ** 2, axis=0, keepdims=True)
        scale = vec(ROW_GAMMA[layer], n) * jax.lax.rsqrt(var + BN_EPS)
        shift = vec(ROW_BETA[layer], n) - mean * scale
        return jnp.maximum(y * scale + shift, 0.0)

    h = x_ref[...]
    h = bn_relu(linear(h, w1_ref[...], 0), 0)       # layer 1 (w2/w3 DMA in flight)
    cp2.wait()
    h = bn_relu(linear(h, w2_buf[...], 1), 1)       # layer 2
    cp3.wait()
    h = bn_relu(linear(h, w3_buf[...], 2), 2)       # layer 3
    h = bn_relu(linear(h, w4_ref[...], 3), 3)       # layer 4
    h = bn_relu(linear(h, w5_ref[...], 4), 4)       # layer 5

    # Final layer: bias + relu, then softmax over the class axis (f32 throughout).
    y = jnp.maximum(linear(h, w6_ref[...], 5) + vec(ROW_B6, num_classes), 0.0)
    m = jnp.max(y, axis=1, keepdims=True)
    e = jnp.exp(y - m)
    denom = jnp.sum(e, axis=1, keepdims=True)
    o_ref[...] = (e * pl.reciprocal(denom, approx=False)).astype(o_ref.dtype)


def _full_spec(shape):
    # Whole-array single block resident in VMEM (gridless call).
    return pl.BlockSpec(shape, lambda: tuple(0 for _ in shape))


def neural_net_forward(x, weights, slab):
    """Fused forward pass: one pallas_call for the whole 6-layer MLP.

    weights: tuple of 6 int8 (in, out) matrices; slab: (24, 1024) f32 packed
    gammas/betas/final-bias/dequant-scales.
    """
    B = x.shape[0]
    w1, w2, w3, w4, w5, w6 = weights
    num_classes = w6.shape[1]

    in_specs = [
        _full_spec(x.shape),
        _full_spec(slab.shape),
        _full_spec(w1.shape),
        pl.BlockSpec(memory_space=pl.ANY),   # w2: manual prefetch inside kernel
        pl.BlockSpec(memory_space=pl.ANY),   # w3: manual prefetch inside kernel
        _full_spec(w4.shape),
        _full_spec(w5.shape),
        _full_spec(w6.shape),
    ]
    scratch_shapes = [
        pltpu.VMEM(w2.shape, jnp.int8),
        pltpu.VMEM(w3.shape, jnp.int8),
        pltpu.SemaphoreType.DMA((2,)),
    ]

    flops = 2 * B * sum(int(w.shape[0]) * int(w.shape[1]) for w in weights)
    weight_bytes = sum(int(w.size) * w.dtype.itemsize for w in weights)
    bytes_accessed = (weight_bytes + int(slab.size) * 4
                      + int(x.size) * 4 + B * num_classes * 4)
    transcendentals = B * num_classes + sum(LAYER_DIMS)   # exp + per-feature rsqrt

    return pl.pallas_call(
        _fused_mlp_kernel,
        out_shape=jax.ShapeDtypeStruct((B, num_classes), jnp.float32),
        in_specs=in_specs,
        out_specs=_full_spec((B, num_classes)),
        scratch_shapes=scratch_shapes,
        compiler_params=pltpu.CompilerParams(
            vmem_limit_bytes=16 * 1024 * 1024,
        ),
        cost_estimate=pl.CostEstimate(
            flops=flops,
            transcendentals=transcendentals,
            bytes_accessed=bytes_accessed,
        ),
    )(x, slab, w1, w2, w3, w4, w5, w6)


neural_net_forward = jax.jit(neural_net_forward)


# ---------------------------------------------------------------------------
# Parameter init (mimics nn.Linear / nn.BatchNorm1d defaults).
# Weights are stored int8 with per-output-channel f32 scales (the effective
# weight of the model is w_i8 * scale).  Linear biases for layers 1-5 are
# omitted: they are exactly cancelled by the BatchNorm mean subtraction.
# ---------------------------------------------------------------------------
def init_params(key, input_size, num_classes):
    dims = [input_size] + LAYER_DIMS + [num_classes]
    params = []
    for i in range(6):
        fan_in, fan_out = dims[i], dims[i + 1]
        key, kw, kb = jax.random.split(key, 3)
        bound = 1.0 / (fan_in ** 0.5)
        # stored as (in, out) == PyTorch weight (out, in) transposed.
        w = jax.random.uniform(kw, (fan_in, fan_out), jnp.float32,
                               minval=-bound, maxval=bound)
        scale = jnp.maximum(jnp.max(jnp.abs(w), axis=0, keepdims=True),
                            1e-6) / 127.0                      # (1, fan_out) f32
        w_i8 = jnp.round(w / scale).astype(jnp.int8)
        layer = {"w": w_i8, "scale": scale}
        if i == 5:
            layer["b"] = jax.random.uniform(kb, (1, fan_out), jnp.float32,
                                            minval=-bound, maxval=bound)
        else:
            # BatchNorm1d default init: weight(gamma)=1, bias(beta)=0.
            layer["gamma"] = jnp.ones((1, fan_out), jnp.float32)
            layer["beta"] = jnp.zeros((1, fan_out), jnp.float32)
        params.append(layer)
    return params


def pack_vector_slab(params, num_classes):
    """Pack gamma/beta (layers 1-5), b6 and all dequant scales into one slab."""
    slab = jnp.zeros((SLAB_ROWS, SLAB_WIDTH), jnp.float32)
    widths = LAYER_DIMS + [num_classes]
    for i in range(5):
        n = widths[i]
        slab = slab.at[ROW_GAMMA[i], :n].set(params[i]["gamma"][0])
        slab = slab.at[ROW_BETA[i], :n].set(params[i]["beta"][0])
    slab = slab.at[ROW_B6, :num_classes].set(params[5]["b"][0])
    for i in range(6):
        slab = slab.at[ROW_SCALE[i], :widths[i]].set(params[i]["scale"][0])
    return slab


# ---------------------------------------------------------------------------
# Pure-JAX reference (same int8-dequant / bf16-operand / f32-accumulate math).
# ---------------------------------------------------------------------------
def _reference_forward(x, params):
    out = x
    for layer in params[:5]:
        y = jnp.dot(
            out.astype(jnp.bfloat16), layer["w"].astype(jnp.bfloat16),
            preferred_element_type=jnp.float32,
        ) * layer["scale"]
        mean = jnp.mean(y, axis=0, keepdims=True)
        var = jnp.mean((y - mean) ** 2, axis=0, keepdims=True)
        y = (y - mean) * jax.lax.rsqrt(var + BN_EPS)
        y = y * layer["gamma"] + layer["beta"]
        out = jnp.maximum(y, 0.0)
    last = params[5]
    y = jnp.dot(
        out.astype(jnp.bfloat16), last["w"].astype(jnp.bfloat16),
        preferred_element_type=jnp.float32,
    ) * last["scale"] + last["b"]
    y = jnp.maximum(y, 0.0)
    return jax.nn.softmax(y, axis=1)


if __name__ == "__main__":
    INPUT_SIZE = 128
    NUM_CLASSES = 16
    BATCH = 8

    key = jax.random.PRNGKey(0)
    key, kx = jax.random.split(key)
    x = jax.random.normal(kx, (BATCH, INPUT_SIZE), jnp.float32)

    params = init_params(key, INPUT_SIZE, NUM_CLASSES)
    weights = tuple(layer["w"] for layer in params)
    slab = pack_vector_slab(params, NUM_CLASSES)

    out = jax.block_until_ready(neural_net_forward(x, weights, slab))
    ref = _reference_forward(x, params)

    assert out.shape == (BATCH, NUM_CLASSES)
    assert bool(jnp.allclose(jnp.sum(out, axis=1), 1.0, atol=1e-5))
    # Kernel and reference use identical dequant/bf16-operand conventions, so the
    # tolerance only needs to cover MXU-vs-XLA accumulation-order differences.
    assert bool(jnp.allclose(out, ref, atol=2e-3, rtol=2e-3))

    print("KERNEL_OK")
</pallas_src>

<mosaic_0001>
module attributes {stable_mosaic.version = 11 : i64} {
  func.func @_fused_mlp_kernel(%arg0: memref<8x128xf32, #tpu.memory_space<vmem>>, %arg1: memref<24x1024xf32, #tpu.memory_space<vmem>>, %arg2: memref<128x1024xi8, #tpu.memory_space<vmem>>, %arg3: memref<1024x512xi8, #tpu.memory_space<any>>, %arg4: memref<512x256xi8, #tpu.memory_space<any>>, %arg5: memref<256x128xi8, #tpu.memory_space<vmem>>, %arg6: memref<128x64xi8, #tpu.memory_space<vmem>>, %arg7: memref<64x16xi8, #tpu.memory_space<vmem>>, %arg8: memref<8x16xf32, #tpu.memory_space<vmem>>, %arg9: memref<1024x512xi8, #tpu.memory_space<vmem>>, %arg10: memref<512x256xi8, #tpu.memory_space<vmem>>, %arg11: memref<2x!tpu.dma_semaphore, #tpu.memory_space<semaphore_mem>>) attributes {dimension_semantics = [], scalar_prefetch = 0 : i64, scratch_operands = 3 : i64, tpu.core_type = #tpu.core_type<tc>} {
    %c0_i32 = arith.constant 0 : i32
    %0 = tpu.memref_slice %arg11[%c0_i32] : memref<2x!tpu.dma_semaphore, #tpu.memory_space<semaphore_mem>> -> memref<1x!tpu.dma_semaphore, #tpu.memory_space<semaphore_mem>>
    %1 = tpu.memref_squeeze %0 : memref<1x!tpu.dma_semaphore, #tpu.memory_space<semaphore_mem>> -> memref<!tpu.dma_semaphore, #tpu.memory_space<semaphore_mem>>
    tpu.enqueue_dma source(%arg3 : memref<1024x512xi8, #tpu.memory_space<any>>) target(%arg9 : memref<1024x512xi8, #tpu.memory_space<vmem>>) target_semaphore(%1 : memref<!tpu.dma_semaphore, #tpu.memory_space<semaphore_mem>>)
    %c1_i32 = arith.constant 1 : i32
    %2 = tpu.memref_slice %arg11[%c1_i32] : memref<2x!tpu.dma_semaphore, #tpu.memory_space<semaphore_mem>> -> memref<1x!tpu.dma_semaphore, #tpu.memory_space<semaphore_mem>>
    %3 = tpu.memref_squeeze %2 : memref<1x!tpu.dma_semaphore, #tpu.memory_space<semaphore_mem>> -> memref<!tpu.dma_semaphore, #tpu.memory_space<semaphore_mem>>
    tpu.enqueue_dma source(%arg4 : memref<512x256xi8, #tpu.memory_space<any>>) target(%arg10 : memref<512x256xi8, #tpu.memory_space<vmem>>) target_semaphore(%3 : memref<!tpu.dma_semaphore, #tpu.memory_space<semaphore_mem>>)
    %c0 = arith.constant 0 : index
    %c0_0 = arith.constant 0 : index
    %4 = vector.load %arg0[%c0, %c0_0] : memref<8x128xf32, #tpu.memory_space<vmem>>, vector<8x128xf32>
    %c0_1 = arith.constant 0 : index
    %c0_2 = arith.constant 0 : index
    %5 = vector.load %arg2[%c0_1, %c0_2] : memref<128x1024xi8, #tpu.memory_space<vmem>>, vector<128x1024xi8>
    %6 = arith.truncf %4 : vector<8x128xf32> to vector<8x128xbf16>
    %7 = arith.sitofp %5 : vector<128x1024xi8> to vector<128x1024xbf16>
    %cst = arith.constant dense<0.000000e+00> : vector<8x1024xf32>
    %8 = tpu.matmul %6, %7, %cst {dimension_numbers = #tpu.dot_dimension_numbers<[1], [0], [0], [1], [0, 0, 1, 1], [], []>} : vector<8x128xbf16>, vector<128x1024xbf16>, vector<8x1024xf32> -> vector<8x1024xf32>
    %c11 = arith.constant 11 : index
    %c0_3 = arith.constant 0 : index
    %9 = vector.load %arg1[%c11, %c0_3] : memref<24x1024xf32, #tpu.memory_space<vmem>>, vector<1x1024xf32>
    %10 = vector.broadcast %9 : vector<1x1024xf32> to vector<8x1024xf32>
    %11 = arith.mulf %8, %10 : vector<8x1024xf32>
    %cst_4 = arith.constant dense<0.000000e+00> : vector<1024xf32>
    %12 = vector.multi_reduction <add>, %11, %cst_4 [0] : vector<8x1024xf32> to vector<1024xf32>
    %13 = vector.shape_cast %12 : vector<1024xf32> to vector<1x1024xf32>
    %cst_5 = arith.constant 8.000000e+00 : f32
    %14 = vector.broadcast %cst_5 : f32 to vector<1x1024xf32>
    %15 = arith.divf %13, %14 : vector<1x1024xf32>
    %16 = vector.broadcast %15 : vector<1x1024xf32> to vector<8x1024xf32>
    %17 = arith.subf %11, %16 : vector<8x1024xf32>
    %18 = arith.mulf %17, %17 : vector<8x1024xf32>
    %cst_6 = arith.constant dense<0.000000e+00> : vector<1024xf32>
    %19 = vector.multi_reduction <add>, %18, %cst_6 [0] : vector<8x1024xf32> to vector<1024xf32>
    %20 = vector.shape_cast %19 : vector<1024xf32> to vector<1x1024xf32>
    %cst_7 = arith.constant 8.000000e+00 : f32
    %21 = vector.broadcast %cst_7 : f32 to vector<1x1024xf32>
    %22 = arith.divf %20, %21 : vector<1x1024xf32>
    %c0_8 = arith.constant 0 : index
    %c0_9 = arith.constant 0 : index
    %23 = vector.load %arg1[%c0_8, %c0_9] : memref<24x1024xf32, #tpu.memory_space<vmem>>, vector<1x1024xf32>
    %cst_10 = arith.constant 9.99999974E-6 : f32
    %24 = vector.broadcast %cst_10 : f32 to vector<1x1024xf32>
    %25 = arith.addf %22, %24 : vector<1x1024xf32>
    %26 = math.rsqrt %25 : vector<1x1024xf32>
    %27 = arith.mulf %23, %26 : vector<1x1024xf32>
    %c1 = arith.constant 1 : index
    %c0_11 = arith.constant 0 : index
    %28 = vector.load %arg1[%c1, %c0_11] : memref<24x1024xf32, #tpu.memory_space<vmem>>, vector<1x1024xf32>
    %29 = arith.mulf %15, %27 : vector<1x1024xf32>
    %30 = arith.subf %28, %29 : vector<1x1024xf32>
    %31 = vector.broadcast %27 : vector<1x1024xf32> to vector<8x1024xf32>
    %32 = arith.mulf %11, %31 : vector<8x1024xf32>
    %33 = vector.broadcast %30 : vector<1x1024xf32> to vector<8x1024xf32>
    %34 = arith.addf %32, %33 : vector<8x1024xf32>
    %cst_12 = arith.constant 0.000000e+00 : f32
    %35 = vector.broadcast %cst_12 : f32 to vector<8x1024xf32>
    %36 = arith.maximumf %34, %35 : vector<8x1024xf32>
    %c0_i32_13 = arith.constant 0 : i32
    %37 = tpu.memref_slice %arg11[%c0_i32_13] : memref<2x!tpu.dma_semaphore, #tpu.memory_space<semaphore_mem>> -> memref<1x!tpu.dma_semaphore, #tpu.memory_space<semaphore_mem>>
    %38 = tpu.memref_squeeze %37 : memref<1x!tpu.dma_semaphore, #tpu.memory_space<semaphore_mem>> -> memref<!tpu.dma_semaphore, #tpu.memory_space<semaphore_mem>>
    tpu.wait_dma2 semaphore(%38 : memref<!tpu.dma_semaphore, #tpu.memory_space<semaphore_mem>>) src(%arg3 : memref<1024x512xi8, #tpu.memory_space<any>>) dst(%arg9 : memref<1024x512xi8, #tpu.memory_space<vmem>>)
    %c0_14 = arith.constant 0 : index
    %c0_15 = arith.constant 0 : index
    %39 = vector.load %arg9[%c0_14, %c0_15] : memref<1024x512xi8, #tpu.memory_space<vmem>>, vector<1024x512xi8>
    %40 = arith.truncf %36 : vector<8x1024xf32> to vector<8x1024xbf16>
    %41 = arith.sitofp %39 : vector<1024x512xi8> to vector<1024x512xbf16>
    %cst_16 = arith.constant dense<0.000000e+00> : vector<8x512xf32>
    %42 = tpu.matmul %40, %41, %cst_16 {dimension_numbers = #tpu.dot_dimension_numbers<[1], [0], [0], [1], [0, 0, 1, 1], [], []>} : vector<8x1024xbf16>, vector<1024x512xbf16>, vector<8x512xf32> -> vector<8x512xf32>
    %c12 = arith.constant 12 : index
    %c0_17 = arith.constant 0 : index
    %43 = vector.load %arg1[%c12, %c0_17] : memref<24x1024xf32, #tpu.memory_space<vmem>>, vector<1x512xf32>
    %44 = vector.broadcast %43 : vector<1x512xf32> to vector<8x512xf32>
    %45 = arith.mulf %42, %44 : vector<8x512xf32>
    %cst_18 = arith.constant dense<0.000000e+00> : vector<512xf32>
    %46 = vector.multi_reduction <add>, %45, %cst_18 [0] : vector<8x512xf32> to vector<512xf32>
    %47 = vector.shape_cast %46 : vector<512xf32> to vector<1x512xf32>
    %cst_19 = arith.constant 8.000000e+00 : f32
    %48 = vector.broadcast %cst_19 : f32 to vector<1x512xf32>
    %49 = arith.divf %47, %48 : vector<1x512xf32>
    %50 = vector.broadcast %49 : vector<1x512xf32> to vector<8x512xf32>
    %51 = arith.subf %45, %50 : vector<8x512xf32>
    %52 = arith.mulf %51, %51 : vector<8x512xf32>
    %cst_20 = arith.constant dense<0.000000e+00> : vector<512xf32>
    %53 = vector.multi_reduction <add>, %52, %cst_20 [0] : vector<8x512xf32> to vector<512xf32>
    %54 = vector.shape_cast %53 : vector<512xf32> to vector<1x512xf32>
    %cst_21 = arith.constant 8.000000e+00 : f32
    %55 = vector.broadcast %cst_21 : f32 to vector<1x512xf32>
    %56 = arith.divf %54, %55 : vector<1x512xf32>
    %c2 = arith.constant 2 : index
    %c0_22 = arith.constant 0 : index
    %57 = vector.load %arg1[%c2, %c0_22] : memref<24x1024xf32, #tpu.memory_space<vmem>>, vector<1x512xf32>
    %cst_23 = arith.constant 9.99999974E-6 : f32
    %58 = vector.broadcast %cst_23 : f32 to vector<1x512xf32>
    %59 = arith.addf %56, %58 : vector<1x512xf32>
    %60 = math.rsqrt %59 : vector<1x512xf32>
    %61 = arith.mulf %57, %60 : vector<1x512xf32>
    %c3 = arith.constant 3 : index
    %c0_24 = arith.constant 0 : index
    %62 = vector.load %arg1[%c3, %c0_24] : memref<24x1024xf32, #tpu.memory_space<vmem>>, vector<1x512xf32>
    %63 = arith.mulf %49, %61 : vector<1x512xf32>
    %64 = arith.subf %62, %63 : vector<1x512xf32>
    %65 = vector.broadcast %61 : vector<1x512xf32> to vector<8x512xf32>
    %66 = arith.mulf %45, %65 : vector<8x512xf32>
    %67 = vector.broadcast %64 : vector<1x512xf32> to vector<8x512xf32>
    %68 = arith.addf %66, %67 : vector<8x512xf32>
    %cst_25 = arith.constant 0.000000e+00 : f32
    %69 = vector.broadcast %cst_25 : f32 to vector<8x512xf32>
    %70 = arith.maximumf %68, %69 : vector<8x512xf32>
    %c1_i32_26 = arith.constant 1 : i32
    %71 = tpu.memref_slice %arg11[%c1_i32_26] : memref<2x!tpu.dma_semaphore, #tpu.memory_space<semaphore_mem>> -> memref<1x!tpu.dma_semaphore, #tpu.memory_space<semaphore_mem>>
    %72 = tpu.memref_squeeze %71 : memref<1x!tpu.dma_semaphore, #tpu.memory_space<semaphore_mem>> -> memref<!tpu.dma_semaphore, #tpu.memory_space<semaphore_mem>>
    tpu.wait_dma2 semaphore(%72 : memref<!tpu.dma_semaphore, #tpu.memory_space<semaphore_mem>>) src(%arg4 : memref<512x256xi8, #tpu.memory_space<any>>) dst(%arg10 : memref<512x256xi8, #tpu.memory_space<vmem>>)
    %c0_27 = arith.constant 0 : index
    %c0_28 = arith.constant 0 : index
    %73 = vector.load %arg10[%c0_27, %c0_28] : memref<512x256xi8, #tpu.memory_space<vmem>>, vector<512x256xi8>
    %74 = arith.truncf %70 : vector<8x512xf32> to vector<8x512xbf16>
    %75 = arith.sitofp %73 : vector<512x256xi8> to vector<512x256xbf16>
    %cst_29 = arith.constant dense<0.000000e+00> : vector<8x256xf32>
    %76 = tpu.matmul %74, %75, %cst_29 {dimension_numbers = #tpu.dot_dimension_numbers<[1], [0], [0], [1], [0, 0, 1, 1], [], []>} : vector<8x512xbf16>, vector<512x256xbf16>, vector<8x256xf32> -> vector<8x256xf32>
    %c13 = arith.constant 13 : index
    %c0_30 = arith.constant 0 : index
    %77 = vector.load %arg1[%c13, %c0_30] : memref<24x1024xf32, #tpu.memory_space<vmem>>, vector<1x256xf32>
    %78 = vector.broadcast %77 : vector<1x256xf32> to vector<8x256xf32>
    %79 = arith.mulf %76, %78 : vector<8x256xf32>
    %cst_31 = arith.constant dense<0.000000e+00> : vector<256xf32>
    %80 = vector.multi_reduction <add>, %79, %cst_31 [0] : vector<8x256xf32> to vector<256xf32>
    %81 = vector.shape_cast %80 : vector<256xf32> to vector<1x256xf32>
    %cst_32 = arith.constant 8.000000e+00 : f32
    %82 = vector.broadcast %cst_32 : f32 to vector<1x256xf32>
    %83 = arith.divf %81, %82 : vector<1x256xf32>
    %84 = vector.broadcast %83 : vector<1x256xf32> to vector<8x256xf32>
    %85 = arith.subf %79, %84 : vector<8x256xf32>
    %86 = arith.mulf %85, %85 : vector<8x256xf32>
    %cst_33 = arith.constant dense<0.000000e+00> : vector<256xf32>
    %87 = vector.multi_reduction <add>, %86, %cst_33 [0] : vector<8x256xf32> to vector<256xf32>
    %88 = vector.shape_cast %87 : vector<256xf32> to vector<1x256xf32>
    %cst_34 = arith.constant 8.000000e+00 : f32
    %89 = vector.broadcast %cst_34 : f32 to vector<1x256xf32>
    %90 = arith.divf %88, %89 : vector<1x256xf32>
    %c4 = arith.constant 4 : index
    %c0_35 = arith.constant 0 : index
    %91 = vector.load %arg1[%c4, %c0_35] : memref<24x1024xf32, #tpu.memory_space<vmem>>, vector<1x256xf32>
    %cst_36 = arith.constant 9.99999974E-6 : f32
    %92 = vector.broadcast %cst_36 : f32 to vector<1x256xf32>
    %93 = arith.addf %90, %92 : vector<1x256xf32>
    %94 = math.rsqrt %93 : vector<1x256xf32>
    %95 = arith.mulf %91, %94 : vector<1x256xf32>
    %c5 = arith.constant 5 : index
    %c0_37 = arith.constant 0 : index
    %96 = vector.load %arg1[%c5, %c0_37] : memref<24x1024xf32, #tpu.memory_space<vmem>>, vector<1x256xf32>
    %97 = arith.mulf %83, %95 : vector<1x256xf32>
    %98 = arith.subf %96, %97 : vector<1x256xf32>
    %99 = vector.broadcast %95 : vector<1x256xf32> to vector<8x256xf32>
    %100 = arith.mulf %79, %99 : vector<8x256xf32>
    %101 = vector.broadcast %98 : vector<1x256xf32> to vector<8x256xf32>
    %102 = arith.addf %100, %101 : vector<8x256xf32>
    %cst_38 = arith.constant 0.000000e+00 : f32
    %103 = vector.broadcast %cst_38 : f32 to vector<8x256xf32>
    %104 = arith.maximumf %102, %103 : vector<8x256xf32>
    %c0_39 = arith.constant 0 : index
    %c0_40 = arith.constant 0 : index
    %105 = vector.load %arg5[%c0_39, %c0_40] : memref<256x128xi8, #tpu.memory_space<vmem>>, vector<256x128xi8>
    %106 = arith.truncf %104 : vector<8x256xf32> to vector<8x256xbf16>
    %107 = arith.sitofp %105 : vector<256x128xi8> to vector<256x128xbf16>
    %cst_41 = arith.constant dense<0.000000e+00> : vector<8x128xf32>
    %108 = tpu.matmul %106, %107, %cst_41 {dimension_numbers = #tpu.dot_dimension_numbers<[1], [0], [0], [1], [0, 0, 1, 1], [], []>} : vector<8x256xbf16>, vector<256x128xbf16>, vector<8x128xf32> -> vector<8x128xf32>
    %c14 = arith.constant 14 : index
    %c0_42 = arith.constant 0 : index
    %109 = vector.load %arg1[%c14, %c0_42] : memref<24x1024xf32, #tpu.memory_space<vmem>>, vector<1x128xf32>
    %110 = vector.broadcast %109 : vector<1x128xf32> to vector<8x128xf32>
    %111 = arith.mulf %108, %110 : vector<8x128xf32>
    %cst_43 = arith.constant dense<0.000000e+00> : vector<128xf32>
    %112 = vector.multi_reduction <add>, %111, %cst_43 [0] : vector<8x128xf32> to vector<128xf32>
    %113 = vector.shape_cast %112 : vector<128xf32> to vector<1x128xf32>
    %cst_44 = arith.constant 8.000000e+00 : f32
    %114 = vector.broadcast %cst_44 : f32 to vector<1x128xf32>
    %115 = arith.divf %113, %114 : vector<1x128xf32>
    %116 = vector.broadcast %115 : vector<1x128xf32> to vector<8x128xf32>
    %117 = arith.subf %111, %116 : vector<8x128xf32>
    %118 = arith.mulf %117, %117 : vector<8x128xf32>
    %cst_45 = arith.constant dense<0.000000e+00> : vector<128xf32>
    %119 = vector.multi_reduction <add>, %118, %cst_45 [0] : vector<8x128xf32> to vector<128xf32>
    %120 = vector.shape_cast %119 : vector<128xf32> to vector<1x128xf32>
    %cst_46 = arith.constant 8.000000e+00 : f32
    %121 = vector.broadcast %cst_46 : f32 to vector<1x128xf32>
    %122 = arith.divf %120, %121 : vector<1x128xf32>
    %c6 = arith.constant 6 : index
    %c0_47 = arith.constant 0 : index
    %123 = vector.load %arg1[%c6, %c0_47] : memref<24x1024xf32, #tpu.memory_space<vmem>>, vector<1x128xf32>
    %cst_48 = arith.constant 9.99999974E-6 : f32
    %124 = vector.broadcast %cst_48 : f32 to vector<1x128xf32>
    %125 = arith.addf %122, %124 : vector<1x128xf32>
    %126 = math.rsqrt %125 : vector<1x128xf32>
    %127 = arith.mulf %123, %126 : vector<1x128xf32>
    %c7 = arith.constant 7 : index
    %c0_49 = arith.constant 0 : index
    %128 = vector.load %arg1[%c7, %c0_49] : memref<24x1024xf32, #tpu.memory_space<vmem>>, vector<1x128xf32>
    %129 = arith.mulf %115, %127 : vector<1x128xf32>
    %130 = arith.subf %128, %129 : vector<1x128xf32>
    %131 = vector.broadcast %127 : vector<1x128xf32> to vector<8x128xf32>
    %132 = arith.mulf %111, %131 : vector<8x128xf32>
    %133 = vector.broadcast %130 : vector<1x128xf32> to vector<8x128xf32>
    %134 = arith.addf %132, %133 : vector<8x128xf32>
    %cst_50 = arith.constant 0.000000e+00 : f32
    %135 = vector.broadcast %cst_50 : f32 to vector<8x128xf32>
    %136 = arith.maximumf %134, %135 : vector<8x128xf32>
    %c0_51 = arith.constant 0 : index
    %c0_52 = arith.constant 0 : index
    %137 = vector.load %arg6[%c0_51, %c0_52] : memref<128x64xi8, #tpu.memory_space<vmem>>, vector<128x64xi8>
    %138 = arith.truncf %136 : vector<8x128xf32> to vector<8x128xbf16>
    %139 = arith.sitofp %137 : vector<128x64xi8> to vector<128x64xbf16>
    %cst_53 = arith.constant dense<0.000000e+00> : vector<8x64xf32>
    %140 = tpu.matmul %138, %139, %cst_53 {dimension_numbers = #tpu.dot_dimension_numbers<[1], [0], [0], [1], [0, 0, 1, 1], [], []>} : vector<8x128xbf16>, vector<128x64xbf16>, vector<8x64xf32> -> vector<8x64xf32>
    %c15 = arith.constant 15 : index
    %c0_54 = arith.constant 0 : index
    %141 = vector.load %arg1[%c15, %c0_54] : memref<24x1024xf32, #tpu.memory_space<vmem>>, vector<1x64xf32>
    %142 = vector.broadcast %141 : vector<1x64xf32> to vector<8x64xf32>
    %143 = arith.mulf %140, %142 : vector<8x64xf32>
    %cst_55 = arith.constant dense<0.000000e+00> : vector<64xf32>
    %144 = vector.multi_reduction <add>, %143, %cst_55 [0] : vector<8x64xf32> to vector<64xf32>
    %145 = vector.shape_cast %144 : vector<64xf32> to vector<1x64xf32>
    %cst_56 = arith.constant 8.000000e+00 : f32
    %146 = vector.broadcast %cst_56 : f32 to vector<1x64xf32>
    %147 = arith.divf %145, %146 : vector<1x64xf32>
    %148 = vector.broadcast %147 : vector<1x64xf32> to vector<8x64xf32>
    %149 = arith.subf %143, %148 : vector<8x64xf32>
    %150 = arith.mulf %149, %149 : vector<8x64xf32>
    %cst_57 = arith.constant dense<0.000000e+00> : vector<64xf32>
    %151 = vector.multi_reduction <add>, %150, %cst_57 [0] : vector<8x64xf32> to vector<64xf32>
    %152 = vector.shape_cast %151 : vector<64xf32> to vector<1x64xf32>
    %cst_58 = arith.constant 8.000000e+00 : f32
    %153 = vector.broadcast %cst_58 : f32 to vector<1x64xf32>
    %154 = arith.divf %152, %153 : vector<1x64xf32>
    %c8 = arith.constant 8 : index
    %c0_59 = arith.constant 0 : index
    %155 = vector.load %arg1[%c8, %c0_59] : memref<24x1024xf32, #tpu.memory_space<vmem>>, vector<1x64xf32>
    %cst_60 = arith.constant 9.99999974E-6 : f32
    %156 = vector.broadcast %cst_60 : f32 to vector<1x64xf32>
    %157 = arith.addf %154, %156 : vector<1x64xf32>
    %158 = math.rsqrt %157 : vector<1x64xf32>
    %159 = arith.mulf %155, %158 : vector<1x64xf32>
    %c9 = arith.constant 9 : index
    %c0_61 = arith.constant 0 : index
    %160 = vector.load %arg1[%c9, %c0_61] : memref<24x1024xf32, #tpu.memory_space<vmem>>, vector<1x64xf32>
    %161 = arith.mulf %147, %159 : vector<1x64xf32>
    %162 = arith.subf %160, %161 : vector<1x64xf32>
    %163 = vector.broadcast %159 : vector<1x64xf32> to vector<8x64xf32>
    %164 = arith.mulf %143, %163 : vector<8x64xf32>
    %165 = vector.broadcast %162 : vector<1x64xf32> to vector<8x64xf32>
    %166 = arith.addf %164, %165 : vector<8x64xf32>
    %cst_62 = arith.constant 0.000000e+00 : f32
    %167 = vector.broadcast %cst_62 : f32 to vector<8x64xf32>
    %168 = arith.maximumf %166, %167 : vector<8x64xf32>
    %c0_63 = arith.constant 0 : index
    %c0_64 = arith.constant 0 : index
    %169 = vector.load %arg7[%c0_63, %c0_64] : memref<64x16xi8, #tpu.memory_space<vmem>>, vector<64x16xi8>
    %170 = arith.truncf %168 : vector<8x64xf32> to vector<8x64xbf16>
    %171 = arith.sitofp %169 : vector<64x16xi8> to vector<64x16xbf16>
    %cst_65 = arith.constant dense<0.000000e+00> : vector<8x16xf32>
    %172 = tpu.matmul %170, %171, %cst_65 {dimension_numbers = #tpu.dot_dimension_numbers<[1], [0], [0], [1], [0, 0, 1, 1], [], []>} : vector<8x64xbf16>, vector<64x16xbf16>, vector<8x16xf32> -> vector<8x16xf32>
    %c16 = arith.constant 16 : index
    %c0_66 = arith.constant 0 : index
    %173 = vector.load %arg1[%c16, %c0_66] : memref<24x1024xf32, #tpu.memory_space<vmem>>, vector<1x16xf32>
    %174 = vector.broadcast %173 : vector<1x16xf32> to vector<8x16xf32>
    %175 = arith.mulf %172, %174 : vector<8x16xf32>
    %c10 = arith.constant 10 : index
    %c0_67 = arith.constant 0 : index
    %176 = vector.load %arg1[%c10, %c0_67] : memref<24x1024xf32, #tpu.memory_space<vmem>>, vector<1x16xf32>
    %177 = vector.broadcast %176 : vector<1x16xf32> to vector<8x16xf32>
    %178 = arith.addf %175, %177 : vector<8x16xf32>
    %cst_68 = arith.constant 0.000000e+00 : f32
    %179 = vector.broadcast %cst_68 : f32 to vector<8x16xf32>
    %180 = arith.maximumf %178, %179 : vector<8x16xf32>
    %cst_69 = arith.constant dense<0xFF800000> : vector<8xf32>
    %181 = vector.multi_reduction <maximumf>, %180, %cst_69 [1] : vector<8x16xf32> to vector<8xf32>
    %182 = vector.shape_cast %181 : vector<8xf32> to vector<8x1xf32>
    %183 = vector.broadcast %182 : vector<8x1xf32> to vector<8x16xf32>
    %184 = arith.subf %180, %183 : vector<8x16xf32>
    %185 = math.exp %184 : vector<8x16xf32>
    %cst_70 = arith.constant dense<0.000000e+00> : vector<8xf32>
    %186 = vector.multi_reduction <add>, %185, %cst_70 [1] : vector<8x16xf32> to vector<8xf32>
    %187 = vector.shape_cast %186 : vector<8xf32> to vector<8x1xf32>
    %188 = tpu.reciprocal %187 : vector<8x1xf32> -> vector<8x1xf32>
    %189 = vector.broadcast %188 : vector<8x1xf32> to vector<8x16xf32>
    %190 = arith.mulf %185, %189 : vector<8x16xf32>
    %c0_71 = arith.constant 0 : index
    %c0_72 = arith.constant 0 : index
    %191 = vector.load %arg8[%c0_71, %c0_72] : memref<8x16xf32, #tpu.memory_space<vmem>>, vector<8x16xf32>
    tpu.vector_store %arg8[%c0_71, %c0_72], %190 {strides = array<i32>} : memref<8x16xf32, #tpu.memory_space<vmem>>, vector<8x16xf32>,
    return
  }
}

</mosaic_0001>

<llo_original>
// kernel: neural_net_forward.1
$region0: #{neural_net_forward.1}
  #allocation0 [shape = 'u32[]', space=smem, size = 0x4, offset = 0x4, fixed_abs, tag = 'smem constant byte address 0x4 - core index']
  #allocation1 [shape = 'u32[144,128]{1,0:T(1,128)}', space=vmem, size = 0x12000, scoped, tag = 'internal scratch']
  #allocation2 [shape = 's8[1024,512]{1,0:T(32,128)(4,1)}', space=vmem, size = 0x80000, scoped, tag = 'scratch operand']
  #allocation3 [shape = 's8[512,256]{1,0:T(32,128)(4,1)}', space=vmem, size = 0x20000, scoped, tag = 'scratch operand']
  #allocation4 [shape = 's32[2]{0}', space=sflag, size = 0x8, scoped, tag = 'scratch operand']
  #allocation12 [shape = 's32[]', space=sflag, size = 0x4, offset = 0, fixed_abs, tag = 'sflag constant byte address 0x0 - dummy sync flag']
  #allocation13 [shape = 's32[]', space=sflag, size = 0x4, offset = 0, fixed_abs, tag = 'sflag constant byte address 0x0 - dummy sync flag']
  #allocation14 [shape = 'u32[]', space=smem, size = 0x4, offset = 0x44, fixed_abs, tag = 'smem constant byte address 0x44 - assertion arg 0']
  #allocation15 [shape = 'u32[]', space=smem, size = 0x4, offset = 0x48, fixed_abs, tag = 'smem constant byte address 0x48 - assertion arg 1']
  #allocation16 [shape = 's32[]', space=sflag, size = 0x4, offset = 0, fixed_abs, tag = 'sflag constant byte address 0x0 - dummy sync flag']
  #allocation17 [shape = 's32[]', space=sflag, size = 0x4, offset = 0, fixed_abs, tag = 'sflag constant byte address 0x0 - dummy sync flag']
  %s0 = inlined_call_operand.hbm [shape: f32[8,128], index: 0, kind: input, shape index: {}]
  %s1 = inlined_call_operand.hbm [shape: f32[24,1024], index: 1, kind: input, shape index: {}]
  %s2 = inlined_call_operand.hbm [shape: s8[128,1024], index: 2, kind: input, shape index: {}]
  %s3 = inlined_call_operand.hbm [shape: s8[1024,512], index: 3, kind: input, shape index: {}]
  %s4 = inlined_call_operand.hbm [shape: s8[512,256], index: 4, kind: input, shape index: {}]
  %s5 = inlined_call_operand.vmem [shape: s8[256,128], index: 5, kind: input, shape index: {}]
  %s6 = inlined_call_operand.vmem [shape: s8[128,64], index: 6, kind: input, shape index: {}]
  %s7 = inlined_call_operand.vmem [shape: s8[64,16], index: 7, kind: input, shape index: {}]
  %s8 = inlined_call_operand.hbm [shape: f32[8,16], index: 8, kind: output, shape index: {}]
  %s9 = sld [smem:[#allocation0]]
  $region54: #{neural_net_forward.1} parent=0
    _
  %s11 = ssub.s32 1, %s9
  %s12 = scalar_select 0, %s11, %s9
  $region1: #{neural_net_forward.1} parent=0
    #allocation5 [shape = 'u8[4096]{0}', space=vmem, size = 0x1000, scoped, tag = 'input window, operand 0, single buffered']
    #allocation6 [shape = 's32[1]{0}', space=sflag, size = 0x4, scoped, tag = 'scoped memory for neural_net_forward.1']
    #allocation7 [shape = 's32[1]{0}', space=sflag, size = 0x4, scoped, tag = 'scoped memory for neural_net_forward.1']
    #allocation8 [shape = 'u8[98304]{0}', space=vmem, size = 0x18000, scoped, tag = 'input window, operand 1, single buffered']
    #allocation9 [shape = 's32[1]{0}', space=sflag, size = 0x4, scoped, tag = 'scoped memory for neural_net_forward.1']
    #allocation10 [shape = 'u8[131072]{0}', space=vmem, size = 0x20000, scoped, tag = 'input window, operand 2, single buffered']
    #allocation11 [shape = 'u8[4096]{0}', space=vmem, size = 0x1000, scoped, tag = 'output window, operand 0, single buffered']
    %13 = vsyncpa [#allocation6], 0
    %14 = vsyncpa [#allocation9], 0
    %15 = vsyncpa [#allocation7], 0
    // Predicated region
    $region2: #{neural_net_forward.1} parent=1 // pred_check
      _
    $region3: #{neural_net_forward.1} parent=1 // pred_check_branch
      %17 = sbr.rel (0) target = $region5
    $region4: #{neural_net_forward.1} parent=1 // pred_region
      %s19 = ssub.s32 128, 128
      %20 = vsyncadd [#allocation6], %s19
      %s22 = sshll.u32 [#allocation5], 4
      %s23 = int_to_ptr.vmem [resolvable:$true] %s22
      %25 = dma.hbm_to_vmem [thread:$0]  %s0, 128, %s23, [#allocation6]
    $region5: #{neural_net_forward.1} parent=1 // pred_fallthru
      _
    // Predicated region
    $region6: #{neural_net_forward.1} parent=1 // pred_check
      _
    $region7: #{neural_net_forward.1} parent=1 // pred_check_branch
      %27 = sbr.rel (0) target = $region9
    $region8: #{neural_net_forward.1} parent=1 // pred_region
      %s29 = ssub.s32 3072, 3072
      %30 = vsyncadd [#allocation9], %s29
      %s31 = sshll.u32 [#allocation8], 4
      %s32 = int_to_ptr.vmem [resolvable:$true] %s31
      %37 = dma.hbm_to_vmem [thread:$0]  %s1, 3072, %s32, [#allocation9], 1024, 1024, 64
    $region9: #{neural_net_forward.1} parent=1 // pred_fallthru
      _
    // Predicated region
    $region10: #{neural_net_forward.1} parent=1 // pred_check
      _
    $region11: #{neural_net_forward.1} parent=1 // pred_check_branch
      %39 = sbr.rel (0) target = $region13
    $region12: #{neural_net_forward.1} parent=1 // pred_region
      %s41 = ssub.s32 4096, 4096
      %42 = vsyncadd [#allocation9], %s41
      %s43 = sshll.u32 [#allocation10], 4
      %s44 = int_to_ptr.vmem [resolvable:$true] %s43
      %49 = dma.hbm_to_vmem [thread:$0]  %s2, 4096, %s44, [#allocation9], 1024, 1024, 64
    $region13: #{neural_net_forward.1} parent=1 // pred_fallthru
      _
    // Predicated region
    $region14: #{neural_net_forward.1} parent=1 // pred_check
      _
    $region15: #{neural_net_forward.1} parent=1 // pred_check_branch
      %51 = sbr.rel (0) target = $region17
    $region16: #{neural_net_forward.1} parent=1 // pred_region
      _
    $region17: #{neural_net_forward.1} parent=1 // pred_fallthru
      _
    // Predicated region
    $region18: #{neural_net_forward.1} parent=1 // pred_check
      _
    $region19: #{neural_net_forward.1} parent=1 // pred_check_branch
      %53 = sbr.rel (0) target = $region21
    $region20: #{neural_net_forward.1} parent=1 // pred_region
      _
    $region21: #{neural_net_forward.1} parent=1 // pred_fallthru
      _
    // Predicated region
    $region22: #{neural_net_forward.1} parent=1 // pred_check
      _
    $region23: #{neural_net_forward.1} parent=1 // pred_check_branch
      %55 = sbr.rel (0) target = $region25
    $region24: #{neural_net_forward.1} parent=1 // pred_region
      _
    $region25: #{neural_net_forward.1} parent=1 // pred_fallthru
      _
    // Predicated region
    $region26: #{neural_net_forward.1} parent=1 // pred_check
      _
    $region27: #{neural_net_forward.1} parent=1 // pred_check_branch
      %57 = sbr.rel (0) target = $region29
    $region28: #{neural_net_forward.1} parent=1 // pred_region
      %58 = dma.done [#allocation6], 128
    $region29: #{neural_net_forward.1} parent=1 // pred_fallthru
      _
    // Predicated region
    $region30: #{neural_net_forward.1} parent=1 // pred_check
      _
    $region31: #{neural_net_forward.1} parent=1 // pred_check_branch
      %60 = sbr.rel (0) target = $region33
    $region32: #{neural_net_forward.1} parent=1 // pred_region
      %61 = dma.done [#allocation9], 3072
    $region33: #{neural_net_forward.1} parent=1 // pred_fallthru
      _
    // Predicated region
    $region34: #{neural_net_forward.1} parent=1 // pred_check
      _
    $region35: #{neural_net_forward.1} parent=1 // pred_check_branch
      %63 = sbr.rel (0) target = $region37
    $region36: #{neural_net_forward.1} parent=1 // pred_region
      %64 = dma.done [#allocation9], 4096
    $region37: #{neural_net_forward.1} parent=1 // pred_fallthru
      _
    // Predicated region
    $region38: #{neural_net_forward.1} parent=1 // pred_check
      _
    $region39: #{neural_net_forward.1} parent=1 // pred_check_branch
      %67 = sbr.rel target = $region41
    $region40: #{neural_net_forward.1} parent=1 // pred_region
      %68 = sst [smem:[#allocation14]] [#allocation13]
      %69 = sst [smem:[#allocation15]] [#allocation12]
    $region41: #{neural_net_forward.1} parent=1 // pred_fallthru
      _
    %71 = shalt.err (0)
    %s73 = sshll.u32 [#allocation2], 4
    %s74 = int_to_ptr.vmem [resolvable:$true] %s73
    %76 = dma.hbm_to_vmem [thread:$0]  %s3, 16384, %s74, [#allocation4]
    %s77 = scalar_lea.sflag [#allocation4], 1
    // Predicated region
    $region42: #{neural_net_forward.1} parent=1 // pred_check
      _
    $region43: #{neural_net_forward.1} parent=1 // pred_check_branch
      %79 = sbr.rel target = $region45
    $region44: #{neural_net_forward.1} parent=1 // pred_region
      %80 = sst [smem:[#allocation14]] [#allocation17]
      %81 = sst [smem:[#allocation15]] [#allocation16]
    $region45: #{neural_net_forward.1} parent=1 // pred_fallthru
      _
    %83 = shalt.err (0)
    %s85 = sshll.u32 [#allocation3], 4
    %s86 = int_to_ptr.vmem [resolvable:$true] %s85
    %88 = dma.hbm_to_vmem [thread:$0]  %s4, 4096, %s86, %s77
    %v89 = vld [vmem:[#allocation5] sm:$0xff]
    %v90 = vld [vmem:[#allocation10] sm:$0xff]
    %v91 = vld [vmem:[#allocation10 + $0x8] sm:$0xff]
    %v92 = vld [vmem:[#allocation10 + $0x10] sm:$0xff]
    %v93 = vld [vmem:[#allocation10 + $0x18] sm:$0xff]
    %v94 = vld [vmem:[#allocation10 + $0x20] sm:$0xff]
    %v95 = vld [vmem:[#allocation10 + $0x28] sm:$0xff]
    %v96 = vld [vmem:[#allocation10 + $0x30] sm:$0xff]
    %v97 = vld [vmem:[#allocation10 + $0x38] sm:$0xff]
    %v98 = vld [vmem:[#allocation10 + $0x40] sm:$0xff]
    %v99 = vld [vmem:[#allocation10 + $0x48] sm:$0xff]
    %v100 = vld [vmem:[#allocation10 + $0x50] sm:$0xff]
    %v101 = vld [vmem:[#allocation10 + $0x58] sm:$0xff]
    %v102 = vld [vmem:[#allocation10 + $0x60] sm:$0xff]
    %v103 = vld [vmem:[#allocation10 + $0x68] sm:$0xff]
    %v104 = vld [vmem:[#allocation10 + $0x70] sm:$0xff]
    %v105 = vld [vmem:[#allocation10 + $0x78] sm:$0xff]
    %v106 = vld [vmem:[#allocation10 + $0x80] sm:$0xff]
    %v107 = vld [vmem:[#allocation10 + $0x88] sm:$0xff]
    %v108 = vld [vmem:[#allocation10 + $0x90] sm:$0xff]
    %v109 = vld [vmem:[#allocation10 + $0x98] sm:$0xff]
    %v110 = vld [vmem:[#allocation10 + $0xa0] sm:$0xff]
    %v111 = vld [vmem:[#allocation10 + $0xa8] sm:$0xff]
    %v112 = vld [vmem:[#allocation10 + $0xb0] sm:$0xff]
    %v113 = vld [vmem:[#allocation10 + $0xb8] sm:$0xff]
    %v114 = vld [vmem:[#allocation10 + $0xc0] sm:$0xff]
    %v115 = vld [vmem:[#allocation10 + $0xc8] sm:$0xff]
    %v116 = vld [vmem:[#allocation10 + $0xd0] sm:$0xff]
    %v117 = vld [vmem:[#allocation10 + $0xd8] sm:$0xff]
    %v118 = vld [vmem:[#allocation10 + $0xe0] sm:$0xff]
    %v119 = vld [vmem:[#allocation10 + $0xe8] sm:$0xff]
    %v120 = vld [vmem:[#allocation10 + $0xf0] sm:$0xff]
    %v121 = vld [vmem:[#allocation10 + $0xf8] sm:$0xff]
    %v122 = vpack.c.bf16 %v89, %v89
    %v123 = vunpack.c.l.s8.bf16 %v90
    %v124 = vunpack.c.l.s8.bf16 %v91
    %v125 = vunpack.c.l.s8.bf16 %v92
    %v126 = vunpack.c.l.s8.bf16 %v93
    %v127 = vunpack.c.l.s8.bf16 %v94
    %v128 = vunpack.c.l.s8.bf16 %v95
    %v129 = vunpack.c.l.s8.bf16 %v96
    %v130 = vunpack.c.l.s8.bf16 %v97
    %v131 = vunpack.c.h.s8.bf16 %v90
    %v132 = vunpack.c.h.s8.bf16 %v91
    %v133 = vunpack.c.h.s8.bf16 %v92
    %v134 = vunpack.c.h.s8.bf16 %v93
    %v135 = vunpack.c.h.s8.bf16 %v94
    %v136 = vunpack.c.h.s8.bf16 %v95
    %v137 = vunpack.c.h.s8.bf16 %v96
    %v138 = vunpack.c.h.s8.bf16 %v97
    %v139 = vunpack.c.l.s8.bf16 %v98
    %v140 = vunpack.c.l.s8.bf16 %v99
    %v141 = vunpack.c.l.s8.bf16 %v100
    %v142 = vunpack.c.l.s8.bf16 %v101
    %v143 = vunpack.c.l.s8.bf16 %v102
    %v144 = vunpack.c.l.s8.bf16 %v103
    %v145 = vunpack.c.l.s8.bf16 %v104
    %v146 = vunpack.c.l.s8.bf16 %v105
    %v147 = vunpack.c.h.s8.bf16 %v98
    %v148 = vunpack.c.h.s8.bf16 %v99
    %v149 = vunpack.c.h.s8.bf16 %v100
    %v150 = vunpack.c.h.s8.bf16 %v101
    %v151 = vunpack.c.h.s8.bf16 %v102
    %v152 = vunpack.c.h.s8.bf16 %v103
    %v153 = vunpack.c.h.s8.bf16 %v104
    %v154 = vunpack.c.h.s8.bf16 %v105
    %v155 = vunpack.c.l.s8.bf16 %v106
    %v156 = vunpack.c.l.s8.bf16 %v107
    %v157 = vunpack.c.l.s8.bf16 %v108
    %v158 = vunpack.c.l.s8.bf16 %v109
    %v159 = vunpack.c.l.s8.bf16 %v110
    %v160 = vunpack.c.l.s8.bf16 %v111
    %v161 = vunpack.c.l.s8.bf16 %v112
    %v162 = vunpack.c.l.s8.bf16 %v113
    %v163 = vunpack.c.h.s8.bf16 %v106
    %v164 = vunpack.c.h.s8.bf16 %v107
    %v165 = vunpack.c.h.s8.bf16 %v108
    %v166 = vunpack.c.h.s8.bf16 %v109
    %v167 = vunpack.c.h.s8.bf16 %v110
    %v168 = vunpack.c.h.s8.bf16 %v111
    %v169 = vunpack.c.h.s8.bf16 %v112
    %v170 = vunpack.c.h.s8.bf16 %v113
    %v171 = vunpack.c.l.s8.bf16 %v114
    %v172 = vunpack.c.l.s8.bf16 %v115
    %v173 = vunpack.c.l.s8.bf16 %v116
    %v174 = vunpack.c.l.s8.bf16 %v117
    %v175 = vunpack.c.l.s8.bf16 %v118
    %v176 = vunpack.c.l.s8.bf16 %v119
    %v177 = vunpack.c.l.s8.bf16 %v120
    %v178 = vunpack.c.l.s8.bf16 %v121
    %v179 = vunpack.c.h.s8.bf16 %v114
    %v180 = vunpack.c.h.s8.bf16 %v115
    %v181 = vunpack.c.h.s8.bf16 %v116
    %v182 = vunpack.c.h.s8.bf16 %v117
    %v183 = vunpack.c.h.s8.bf16 %v118
    %v184 = vunpack.c.h.s8.bf16 %v119
    %v185 = vunpack.c.h.s8.bf16 %v120
    %v186 = vunpack.c.h.s8.bf16 %v121
    %187 = vmatprep.subr.bf16.mxu0 %v124
    %188 = vmatpush1.bf16.msra.mxu0 %v123
    %189 = vmatprep.subr.bf16.mxu0 %v132
    %190 = vmatpush1.bf16.msra.mxu0 %v131
    %191 = vmatprep.subr.bf16.mxu0 %v140
    %192 = vmatpush1.bf16.msra.mxu0 %v139
    %193 = vmatprep.subr.bf16.mxu0 %v148
    %194 = vmatpush1.bf16.msra.mxu0 %v147
    %195 = vmatprep.subr.bf16.mxu0 %v156
    %196 = vmatpush1.bf16.msra.mxu0 %v155
    %197 = vmatprep.subr.bf16.mxu0 %v164
    %198 = vmatpush1.bf16.msra.mxu0 %v163
    %199 = vmatprep.subr.bf16.mxu0 %v172
    %200 = vmatpush1.bf16.msra.mxu0 %v171
    %201 = vmatprep.subr.bf16.mxu0 %v180
    %202 = vmatpush1.bf16.msra.mxu0 %v179
    %203 = vmatprep.subr.bf16.mxu0 0
    %204 = vmatpush1.bf16.msra.mxu0 0
    %205 = vmatprep.subr.bf16.mxu0 0
    %206 = vmatpush1.bf16.msra.mxu0 0
    %207 = vmatprep.subr.bf16.mxu0 0
    %208 = vmatpush1.bf16.msra.mxu0 0
    %209 = vmatprep.subr.bf16.mxu0 0
    %210 = vmatpush1.bf16.msra.mxu0 0
    %211 = vmatprep.subr.bf16.mxu0 0
    %212 = vmatpush1.bf16.msra.mxu0 0
    %213 = vmatprep.subr.bf16.mxu0 0
    %214 = vmatpush1.bf16.msra.mxu0 0
    %215 = vmatprep.subr.bf16.mxu0 0
    %216 = vmatpush1.bf16.msra.mxu0 0
    %217 = vmatprep.subr.bf16.mxu0 0
    %218 = vmatpush1.bf16.msra.mxu0 0
    %219 = vmatprep.mubr.bf16.mxu0 0
    %220 = vmatmul.mubr.bf16.gmra.mrb[0].mxu0 %v122
    %v221 = vpop.f32.mrb[0].mxu0
    %v222 = vadd.f32 0.0, %v221
    %v223 = vpop.f32.mrb[0].mxu0
    %v224 = vadd.f32 0.0, %v223
    %v225 = vpop.f32.mrb[0].mxu0
    %v226 = vpop.f32.mrb[0].mxu0
    %227 = vdwg.mxu0
    %228 = vmatprep.subr.bf16.mxu0 %v126
    %229 = vmatpush1.bf16.msra.mxu0 %v125
    %230 = vmatprep.subr.bf16.mxu0 %v134
    %231 = vmatpush1.bf16.msra.mxu0 %v133
    %232 = vmatprep.subr.bf16.mxu0 %v142
    %233 = vmatpush1.bf16.msra.mxu0 %v141
    %234 = vmatprep.subr.bf16.mxu0 %v150
    %235 = vmatpush1.bf16.msra.mxu0 %v149
    %236 = vmatprep.subr.bf16.mxu0 %v158
    %237 = vmatpush1.bf16.msra.mxu0 %v157
    %238 = vmatprep.subr.bf16.mxu0 %v166
    %239 = vmatpush1.bf16.msra.mxu0 %v165
    %240 = vmatprep.subr.bf16.mxu0 %v174
    %241 = vmatpush1.bf16.msra.mxu0 %v173
    %242 = vmatprep.subr.bf16.mxu0 %v182
    %243 = vmatpush1.bf16.msra.mxu0 %v181
    %244 = vmatprep.subr.bf16.mxu0 0
    %245 = vmatpush1.bf16.msra.mxu0 0
    %246 = vmatprep.subr.bf16.mxu0 0
    %247 = vmatpush1.bf16.msra.mxu0 0
    %248 = vmatprep.subr.bf16.mxu0 0
    %249 = vmatpush1.bf16.msra.mxu0 0
    %250 = vmatprep.subr.bf16.mxu0 0
    %251 = vmatpush1.bf16.msra.mxu0 0
    %252 = vmatprep.subr.bf16.mxu0 0
    %253 = vmatpush1.bf16.msra.mxu0 0
    %254 = vmatprep.subr.bf16.mxu0 0
    %255 = vmatpush1.bf16.msra.mxu0 0
    %256 = vmatprep.subr.bf16.mxu0 0
    %257 = vmatpush1.bf16.msra.mxu0 0
    %258 = vmatprep.subr.bf16.mxu0 0
    %259 = vmatpush1.bf16.msra.mxu0 0
    %260 = vmatprep.mubr.bf16.mxu0 0
    %261 = vmatmul.mubr.bf16.gmra.mrb[0].mxu0 %v122
    %v262 = vpop.f32.mrb[0].mxu0
    %v263 = vadd.f32 0.0, %v262
    %v264 = vpop.f32.mrb[0].mxu0
    %v265 = vadd.f32 0.0, %v264
    %v266 = vpop.f32.mrb[0].mxu0
    %v267 = vpop.f32.mrb[0].mxu0
    %268 = vdwg.mxu0
    %269 = vmatprep.subr.bf16.mxu0 %v128
    %270 = vmatpush1.bf16.msra.mxu0 %v127
    %271 = vmatprep.subr.bf16.mxu0 %v136
    %272 = vmatpush1.bf16.msra.mxu0 %v135
    %273 = vmatprep.subr.bf16.mxu0 %v144
    %274 = vmatpush1.bf16.msra.mxu0 %v143
    %275 = vmatprep.subr.bf16.mxu0 %v152
    %276 = vmatpush1.bf16.msra.mxu0 %v151
    %277 = vmatprep.subr.bf16.mxu0 %v160
    %278 = vmatpush1.bf16.msra.mxu0 %v159
    %279 = vmatprep.subr.bf16.mxu0 %v168
    %280 = vmatpush1.bf16.msra.mxu0 %v167
    %281 = vmatprep.subr.bf16.mxu0 %v176
    %282 = vmatpush1.bf16.msra.mxu0 %v175
    %283 = vmatprep.subr.bf16.mxu0 %v184
    %284 = vmatpush1.bf16.msra.mxu0 %v183
    %285 = vmatprep.subr.bf16.mxu0 0
    %286 = vmatpush1.bf16.msra.mxu0 0
    %287 = vmatprep.subr.bf16.mxu0 0
    %288 = vmatpush1.bf16.msra.mxu0 0
    %289 = vmatprep.subr.bf16.mxu0 0
    %290 = vmatpush1.bf16.msra.mxu0 0
    %291 = vmatprep.subr.bf16.mxu0 0
    %292 = vmatpush1.bf16.msra.mxu0 0
    %293 = vmatprep.subr.bf16.mxu0 0
    %294 = vmatpush1.bf16.msra.mxu0 0
    %295 = vmatprep.subr.bf16.mxu0 0
    %296 = vmatpush1.bf16.msra.mxu0 0
    %297 = vmatprep.subr.bf16.mxu0 0
    %298 = vmatpush1.bf16.msra.mxu0 0
    %299 = vmatprep.subr.bf16.mxu0 0
    %300 = vmatpush1.bf16.msra.mxu0 0
    %301 = vmatprep.mubr.bf16.mxu0 0
    %302 = vmatmul.mubr.bf16.gmra.mrb[0].mxu0 %v122
    %v303 = vpop.f32.mrb[0].mxu0
    %v304 = vadd.f32 0.0, %v303
    %v305 = vpop.f32.mrb[0].mxu0
    %v306 = vadd.f32 0.0, %v305
    %v307 = vpop.f32.mrb[0].mxu0
    %v308 = vpop.f32.mrb[0].mxu0
    %309 = vdwg.mxu0
    %310 = vmatprep.subr.bf16.mxu0 %v130
    %311 = vmatpush1.bf16.msra.mxu0 %v129
    %312 = vmatprep.subr.bf16.mxu0 %v138
    %313 = vmatpush1.bf16.msra.mxu0 %v137
    %314 = vmatprep.subr.bf16.mxu0 %v146
    %315 = vmatpush1.bf16.msra.mxu0 %v145
    %316 = vmatprep.subr.bf16.mxu0 %v154
    %317 = vmatpush1.bf16.msra.mxu0 %v153
    %318 = vmatprep.subr.bf16.mxu0 %v162
    %319 = vmatpush1.bf16.msra.mxu0 %v161
    %320 = vmatprep.subr.bf16.mxu0 %v170
    %321 = vmatpush1.bf16.msra.mxu0 %v169
    %322 = vmatprep.subr.bf16.mxu0 %v178
    %323 = vmatpush1.bf16.msra.mxu0 %v177
    %324 = vmatprep.subr.bf16.mxu0 %v186
    %325 = vmatpush1.bf16.msra.mxu0 %v185
    %326 = vmatprep.subr.bf16.mxu0 0
    %327 = vmatpush1.bf16.msra.mxu0 0
    %328 = vmatprep.subr.bf16.mxu0 0
    %329 = vmatpush1.bf16.msra.mxu0 0
    %330 = vmatprep.subr.bf16.mxu0 0
    %331 = vmatpush1.bf16.msra.mxu0 0
    %332 = vmatprep.subr.bf16.mxu0 0
    %333 = vmatpush1.bf16.msra.mxu0 0
    %334 = vmatprep.subr.bf16.mxu0 0
    %335 = vmatpush1.bf16.msra.mxu0 0
    %336 = vmatprep.subr.bf16.mxu0 0
    %337 = vmatpush1.bf16.msra.mxu0 0
    %338 = vmatprep.subr.bf16.mxu0 0
    %339 = vmatpush1.bf16.msra.mxu0 0
    %340 = vmatprep.subr.bf16.mxu0 0
    %341 = vmatpush1.bf16.msra.mxu0 0
    %342 = vmatprep.mubr.bf16.mxu0 0
    %343 = vmatmul.mubr.bf16.gmra.mrb[0].mxu0 %v122
    %v344 = vpop.f32.mrb[0].mxu0
    %v345 = vadd.f32 0.0, %v344
    %v346 = vpop.f32.mrb[0].mxu0
    %v347 = vadd.f32 0.0, %v346
    %v348 = vpop.f32.mrb[0].mxu0
    %v349 = vpop.f32.mrb[0].mxu0
    %350 = vdwg.mxu0
    %s351 = scalar_lea.vmem [#allocation8], 67
    %v352 = vld [vmem:[%s351] ss:$8 sm:$0xf]
    %v353 = vld [vmem:[%s351] ss:$8 sm:$0xf0]
    %v354 = vor.u32 %v352, %v353
    %v356 = vlaneseq
    %v357 = vshrl.u32 %v356, 7
    %v358 = vsub.s32 0, %v357
    %v359 = vrot.slane %v354, %v358
    %v360 = vlaneseq
    %v361 = vshrl.u32 %v360, 7
    %v362 = vsub.s32 1, %v361
    %v363 = vrot.slane %v354, %v362
    %v364 = vlaneseq
    %v365 = vshrl.u32 %v364, 7
    %v366 = vsub.s32 2, %v365
    %v367 = vrot.slane %v354, %v366
    %v368 = vlaneseq
    %v369 = vshrl.u32 %v368, 7
    %v370 = vsub.s32 3, %v369
    %v371 = vrot.slane %v354, %v370
    %v372 = vlaneseq
    %v373 = vshrl.u32 %v372, 7
    %v374 = vsub.s32 4, %v373
    %v375 = vrot.slane %v354, %v374
    %v376 = vlaneseq
    %v377 = vshrl.u32 %v376, 7
    %v378 = vsub.s32 5, %v377
    %v379 = vrot.slane %v354, %v378
    %v380 = vlaneseq
    %v381 = vshrl.u32 %v380, 7
    %v382 = vsub.s32 6, %v381
    %v383 = vrot.slane %v354, %v382
    %v384 = vlaneseq
    %v385 = vshrl.u32 %v384, 7
    %v386 = vsub.s32 7, %v385
    %v387 = vrot.slane %v354, %v386
    %v396 = vmul.f32 %v222, %v359
    %v397 = vmul.f32 %v224, %v363
    %v398 = vmul.f32 %v263, %v367
    %v399 = vmul.f32 %v265, %v371
    %v400 = vmul.f32 %v304, %v375
    %v401 = vmul.f32 %v306, %v379
    %v402 = vmul.f32 %v345, %v383
    %v403 = vmul.f32 %v347, %v387
    %v404 = vrot.slane %v396, 4
    %v405 = vadd.f32 %v396, %v404
    %v406 = vrot.slane %v405, 2
    %v407 = vadd.f32 %v405, %v406
    %v408 = vrot.slane %v407, 1
    %v409 = vadd.f32 %v407, %v408
    %v410 = vrot.slane %v397, 4
    %v411 = vadd.f32 %v397, %v410
    %v412 = vrot.slane %v411, 2
    %v413 = vadd.f32 %v411, %v412
    %v414 = vrot.slane %v413, 1
    %v415 = vadd.f32 %v413, %v414
    %v416 = vrot.slane %v398, 4
    %v417 = vadd.f32 %v398, %v416
    %v418 = vrot.slane %v417, 2
    %v419 = vadd.f32 %v417, %v418
    %v420 = vrot.slane %v419, 1
    %v421 = vadd.f32 %v419, %v420
    %v422 = vrot.slane %v399, 4
    %v423 = vadd.f32 %v399, %v422
    %v424 = vrot.slane %v423, 2
    %v425 = vadd.f32 %v423, %v424
    %v426 = vrot.slane %v425, 1
    %v427 = vadd.f32 %v425, %v426
    %v428 = vrot.slane %v400, 4
    %v429 = vadd.f32 %v400, %v428
    %v430 = vrot.slane %v429, 2
    %v431 = vadd.f32 %v429, %v430
    %v432 = vrot.slane %v431, 1
    %v433 = vadd.f32 %v431, %v432
    %v434 = vrot.slane %v401, 4
    %v435 = vadd.f32 %v401, %v434
    %v436 = vrot.slane %v435, 2
    %v437 = vadd.f32 %v435, %v436
    %v438 = vrot.slane %v437, 1
    %v439 = vadd.f32 %v437, %v438
    %v440 = vrot.slane %v402, 4
    %v441 = vadd.f32 %v402, %v440
    %v442 = vrot.slane %v441, 2
    %v443 = vadd.f32 %v441, %v442
    %v444 = vrot.slane %v443, 1
    %v445 = vadd.f32 %v443, %v444
    %v446 = vrot.slane %v403, 4
    %v447 = vadd.f32 %v403, %v446
    %v448 = vrot.slane %v447, 2
    %v449 = vadd.f32 %v447, %v448
    %v450 = vrot.slane %v449, 1
    %v451 = vadd.f32 %v449, %v450
    %v452 = vrcp.pop 8.0
    %v453 = vmul.f32 %v409, %v452
    %v454 = vmul.f32 %v415, %v452
    %v455 = vmul.f32 %v421, %v452
    %v456 = vmul.f32 %v427, %v452
    %v457 = vmul.f32 %v433, %v452
    %v458 = vmul.f32 %v439, %v452
    %v459 = vmul.f32 %v445, %v452
    %v460 = vmul.f32 %v451, %v452
    %v461 = vsub.f32 %v396, %v453
    %v462 = vsub.f32 %v397, %v454
    %v463 = vsub.f32 %v398, %v455
    %v464 = vsub.f32 %v399, %v456
    %v465 = vsub.f32 %v400, %v457
    %v466 = vsub.f32 %v401, %v458
    %v467 = vsub.f32 %v402, %v459
    %v468 = vsub.f32 %v403, %v460
    %v469 = vmul.f32 %v461, %v461
    %v470 = vmul.f32 %v462, %v462
    %v471 = vmul.f32 %v463, %v463
    %v472 = vmul.f32 %v464, %v464
    %v473 = vmul.f32 %v465, %v465
    %v474 = vmul.f32 %v466, %v466
    %v475 = vmul.f32 %v467, %v467
    %v476 = vmul.f32 %v468, %v468
    %v477 = vrot.slane %v469, 4
    %v478 = vadd.f32 %v469, %v477
    %v479 = vrot.slane %v478, 2
    %v480 = vadd.f32 %v478, %v479
    %v481 = vrot.slane %v480, 1
    %v482 = vadd.f32 %v480, %v481
    %v483 = vrot.slane %v470, 4
    %v484 = vadd.f32 %v470, %v483
    %v485 = vrot.slane %v484, 2
    %v486 = vadd.f32 %v484, %v485
    %v487 = vrot.slane %v486, 1
    %v488 = vadd.f32 %v486, %v487
    %v489 = vrot.slane %v471, 4
    %v490 = vadd.f32 %v471, %v489
    %v491 = vrot.slane %v490, 2
    %v492 = vadd.f32 %v490, %v491
    %v493 = vrot.slane %v492, 1
    %v494 = vadd.f32 %v492, %v493
    %v495 = vrot.slane %v472, 4
    %v496 = vadd.f32 %v472, %v495
    %v497 = vrot.slane %v496, 2
    %v498 = vadd.f32 %v496, %v497
    %v499 = vrot.slane %v498, 1
    %v500 = vadd.f32 %v498, %v499
    %v501 = vrot.slane %v473, 4
    %v502 = vadd.f32 %v473, %v501
    %v503 = vrot.slane %v502, 2
    %v504 = vadd.f32 %v502, %v503
    %v505 = vrot.slane %v504, 1
    %v506 = vadd.f32 %v504, %v505
    %v507 = vrot.slane %v474, 4
    %v508 = vadd.f32 %v474, %v507
    %v509 = vrot.slane %v508, 2
    %v510 = vadd.f32 %v508, %v509
    %v511 = vrot.slane %v510, 1
    %v512 = vadd.f32 %v510, %v511
    %v513 = vrot.slane %v475, 4
    %v514 = vadd.f32 %v475, %v513
    %v515 = vrot.slane %v514, 2
    %v516 = vadd.f32 %v514, %v515
    %v517 = vrot.slane %v516, 1
    %v518 = vadd.f32 %v516, %v517
    %v519 = vrot.slane %v476, 4
    %v520 = vadd.f32 %v476, %v519
    %v521 = vrot.slane %v520, 2
    %v522 = vadd.f32 %v520, %v521
    %v523 = vrot.slane %v522, 1
    %v524 = vadd.f32 %v522, %v523
    %v525 = vmul.f32 %v482, %v452
    %v526 = vmul.f32 %v488, %v452
    %v527 = vmul.f32 %v494, %v452
    %v528 = vmul.f32 %v500, %v452
    %v529 = vmul.f32 %v506, %v452
    %v530 = vmul.f32 %v512, %v452
    %v531 = vmul.f32 %v518, %v452
    %v532 = vmul.f32 %v524, %v452
    %v533 = vld [vmem:[#allocation8] ss:$8 sm:$0xf]
    %v534 = vld [vmem:[#allocation8] ss:$8 sm:$0xf0]
    %v535 = vor.u32 %v533, %v534
    %v536 = vadd.f32 %v525, 1e-05
    %v537 = vadd.f32 %v526, 1e-05
    %v538 = vadd.f32 %v527, 1e-05
    %v539 = vadd.f32 %v528, 1e-05
    %v540 = vadd.f32 %v529, 1e-05
    %v541 = vadd.f32 %v530, 1e-05
    %v542 = vadd.f32 %v531, 1e-05
    %v543 = vadd.f32 %v532, 1e-05
    %v544 = vrsqrt.pop %v536
    %v545 = vrsqrt.pop %v537
    %v546 = vrsqrt.pop %v538
    %v547 = vrsqrt.pop %v539
    %v548 = vrsqrt.pop %v540
    %v549 = vrsqrt.pop %v541
    %v550 = vrsqrt.pop %v542
    %v551 = vrsqrt.pop %v543
    %v560 = vcombine.low %v544, %v545
    %v561 = vcombine.low %v546, %v547
    %v562 = vcombine.low %v548, %v549
    %v563 = vcombine.low %v550, %v551
    %v565 = vunpack.c.l.s4 1966171168
    %v566 = vunpack.c.0.s8 %v565
    %v567 = vlaneseq
    %v568 = vshrl.u32 %v567, 7
    %v569 = vsub.s32 %v566, %v568
    %v570 = vrot.slane %v560, %v569
    %v572 = vunpack.c.l.s4 1966171168
    %v573 = vunpack.c.0.s8 %v572
    %v574 = vlaneseq
    %v575 = vshrl.u32 %v574, 7
    %v576 = vsub.s32 %v573, %v575
    %v577 = vrot.slane %v561, %v576
    %v579 = vunpack.c.l.s4 1966171168
    %v580 = vunpack.c.0.s8 %v579
    %v581 = vlaneseq
    %v582 = vshrl.u32 %v581, 7
    %v583 = vsub.s32 %v580, %v582
    %v584 = vrot.slane %v562, %v583
    %v586 = vunpack.c.l.s4 1966171168
    %v587 = vunpack.c.0.s8 %v586
    %v588 = vlaneseq
    %v589 = vshrl.u32 %v588, 7
    %v590 = vsub.s32 %v587, %v589
    %v591 = vrot.slane %v563, %v590
    %v592 = vcombine.low %v570, %v577
    %v593 = vcombine.low %v584, %v591
    %v595 = vunpack.c.l.s4 1966171168
    %v596 = vunpack.c.0.s8 %v595
    %v597 = vlaneseq
    %v598 = vshrl.u32 %v597, 7
    %v599 = vsub.s32 %v596, %v598
    %v600 = vrot.slane %v592, %v599
    %v602 = vunpack.c.l.s4 1966171168
    %v603 = vunpack.c.0.s8 %v602
    %v604 = vlaneseq
    %v605 = vshrl.u32 %v604, 7
    %v606 = vsub.s32 %v603, %v605
    %v607 = vrot.slane %v593, %v606
    %v608 = vcombine.low %v600, %v607
    %v610 = vmul.f32 %v535, %v608
    %s611 = scalar_lea.vmem [#allocation8], 1
    %v612 = vld [vmem:[%s611] ss:$8 sm:$0xf]
    %v613 = vld [vmem:[%s611] ss:$8 sm:$0xf0]
    %v614 = vor.u32 %v612, %v613
    %v616 = vlaneseq
    %v617 = vshrl.u32 %v616, 7
    %v618 = vsub.s32 0, %v617
    %v619 = vrot.slane %v610, %v618
    %v620 = vlaneseq
    %v621 = vshrl.u32 %v620, 7
    %v622 = vsub.s32 1, %v621
    %v623 = vrot.slane %v610, %v622
    %v624 = vlaneseq
    %v625 = vshrl.u32 %v624, 7
    %v626 = vsub.s32 2, %v625
    %v627 = vrot.slane %v610, %v626
    %v628 = vlaneseq
    %v629 = vshrl.u32 %v628, 7
    %v630 = vsub.s32 3, %v629
    %v631 = vrot.slane %v610, %v630
    %v632 = vlaneseq
    %v633 = vshrl.u32 %v632, 7
    %v634 = vsub.s32 4, %v633
    %v635 = vrot.slane %v610, %v634
    %v636 = vlaneseq
    %v637 = vshrl.u32 %v636, 7
    %v638 = vsub.s32 5, %v637
    %v639 = vrot.slane %v610, %v638
    %v640 = vlaneseq
    %v641 = vshrl.u32 %v640, 7
    %v642 = vsub.s32 6, %v641
    %v643 = vrot.slane %v610, %v642
    %v644 = vlaneseq
    %v645 = vshrl.u32 %v644, 7
    %v646 = vsub.s32 7, %v645
    %v647 = vrot.slane %v610, %v646
    %v656 = vmul.f32 %v453, %v619
    %v657 = vmul.f32 %v454, %v623
    %v658 = vmul.f32 %v455, %v627
    %v659 = vmul.f32 %v456, %v631
    %v660 = vmul.f32 %v457, %v635
    %v661 = vmul.f32 %v458, %v639
    %v662 = vmul.f32 %v459, %v643
    %v663 = vmul.f32 %v460, %v647
    %v672 = vcombine.low %v656, %v657
    %v673 = vcombine.low %v658, %v659
    %v674 = vcombine.low %v660, %v661
    %v675 = vcombine.low %v662, %v663
    %v677 = vunpack.c.l.s4 1966171168
    %v678 = vunpack.c.0.s8 %v677
    %v679 = vlaneseq
    %v680 = vshrl.u32 %v679, 7
    %v681 = vsub.s32 %v678, %v680
    %v682 = vrot.slane %v672, %v681
    %v684 = vunpack.c.l.s4 1966171168
    %v685 = vunpack.c.0.s8 %v684
    %v686 = vlaneseq
    %v687 = vshrl.u32 %v686, 7
    %v688 = vsub.s32 %v685, %v687
    %v689 = vrot.slane %v673, %v688
    %v691 = vunpack.c.l.s4 1966171168
    %v692 = vunpack.c.0.s8 %v691
    %v693 = vlaneseq
    %v694 = vshrl.u32 %v693, 7
    %v695 = vsub.s32 %v692, %v694
    %v696 = vrot.slane %v674, %v695
    %v698 = vunpack.c.l.s4 1966171168
    %v699 = vunpack.c.0.s8 %v698
    %v700 = vlaneseq
    %v701 = vshrl.u32 %v700, 7
    %v702 = vsub.s32 %v699, %v701
    %v703 = vrot.slane %v675, %v702
    %v704 = vcombine.low %v682, %v689
    %v705 = vcombine.low %v696, %v703
    %v707 = vunpack.c.l.s4 1966171168
    %v708 = vunpack.c.0.s8 %v707
    %v709 = vlaneseq
    %v710 = vshrl.u32 %v709, 7
    %v711 = vsub.s32 %v708, %v710
    %v712 = vrot.slane %v704, %v711
    %v714 = vunpack.c.l.s4 1966171168
    %v715 = vunpack.c.0.s8 %v714
    %v716 = vlaneseq
    %v717 = vshrl.u32 %v716, 7
    %v718 = vsub.s32 %v715, %v717
    %v719 = vrot.slane %v705, %v718
    %v720 = vcombine.low %v712, %v719
    %v722 = vsub.f32 %v614, %v720
    %v723 = vmul.f32 %v396, %v619
    %v724 = vmul.f32 %v397, %v623
    %v725 = vmul.f32 %v398, %v627
    %v726 = vmul.f32 %v399, %v631
    %v727 = vmul.f32 %v400, %v635
    %v728 = vmul.f32 %v401, %v639
    %v729 = vmul.f32 %v402, %v643
    %v730 = vmul.f32 %v403, %v647
    %v732 = vlaneseq
    %v733 = vshrl.u32 %v732, 7
    %v734 = vsub.s32 0, %v733
    %v735 = vrot.slane %v722, %v734
    %v736 = vlaneseq
    %v737 = vshrl.u32 %v736, 7
    %v738 = vsub.s32 1, %v737
    %v739 = vrot.slane %v722, %v738
    %v740 = vlaneseq
    %v741 = vshrl.u32 %v740, 7
    %v742 = vsub.s32 2, %v741
    %v743 = vrot.slane %v722, %v742
    %v744 = vlaneseq
    %v745 = vshrl.u32 %v744, 7
    %v746 = vsub.s32 3, %v745
    %v747 = vrot.slane %v722, %v746
    %v748 = vlaneseq
    %v749 = vshrl.u32 %v748, 7
    %v750 = vsub.s32 4, %v749
    %v751 = vrot.slane %v722, %v750
    %v752 = vlaneseq
    %v753 = vshrl.u32 %v752, 7
    %v754 = vsub.s32 5, %v753
    %v755 = vrot.slane %v722, %v754
    %v756 = vlaneseq
    %v757 = vshrl.u32 %v756, 7
    %v758 = vsub.s32 6, %v757
    %v759 = vrot.slane %v722, %v758
    %v760 = vlaneseq
    %v761 = vshrl.u32 %v760, 7
    %v762 = vsub.s32 7, %v761
    %v763 = vrot.slane %v722, %v762
    %v772 = vadd.f32 %v723, %v735
    %v773 = vadd.f32 %v724, %v739
    %v774 = vadd.f32 %v725, %v743
    %v775 = vadd.f32 %v726, %v747
    %v776 = vadd.f32 %v727, %v751
    %v777 = vadd.f32 %v728, %v755
    %v778 = vadd.f32 %v729, %v759
    %v779 = vadd.f32 %v730, %v763
    %v780 = vmax.f32 %v772, 0.0
    %v781 = vmax.f32 %v773, 0.0
    %v782 = vmax.f32 %v774, 0.0
    %v783 = vmax.f32 %v775, 0.0
    %v784 = vmax.f32 %v776, 0.0
    %v785 = vmax.f32 %v777, 0.0
    %v786 = vmax.f32 %v778, 0.0
    %v787 = vmax.f32 %v779, 0.0
    %s788 = smul.u32 2, 128
    %s789 = smul.u32 %s788, 4
    %s790 = sshll.u32 %s789, 4
    %791 = dma.done [#allocation4], %s790
    %v792 = vld [vmem:[#allocation2] sm:$0xff]
    %v793 = vld [vmem:[#allocation2 + $0x8] sm:$0xff]
    %v794 = vld [vmem:[#allocation2 + $0x10] sm:$0xff]
    %v795 = vld [vmem:[#allocation2 + $0x18] sm:$0xff]
    %v796 = vld [vmem:[#allocation2 + $0x20] sm:$0xff]
    %v797 = vld [vmem:[#allocation2 + $0x28] sm:$0xff]
    %v798 = vld [vmem:[#allocation2 + $0x30] sm:$0xff]
    %v799 = vld [vmem:[#allocation2 + $0x38] sm:$0xff]
    %v800 = vld [vmem:[#allocation2 + $0x40] sm:$0xff]
    %v801 = vld [vmem:[#allocation2 + $0x48] sm:$0xff]
    %v802 = vld [vmem:[#allocation2 + $0x50] sm:$0xff]
    %v803 = vld [vmem:[#allocation2 + $0x58] sm:$0xff]
    %v804 = vld [vmem:[#allocation2 + $0x60] sm:$0xff]
    %v805 = vld [vmem:[#allocation2 + $0x68] sm:$0xff]
    %v806 = vld [vmem:[#allocation2 + $0x70] sm:$0xff]
    %v807 = vld [vmem:[#allocation2 + $0x78] sm:$0xff]
    %v808 = vld [vmem:[#allocation2 + $0x80] sm:$0xff]
    %v809 = vld [vmem:[#allocation2 + $0x88] sm:$0xff]
    %v810 = vld [vmem:[#allocation2 + $0x90] sm:$0xff]
    %v811 = vld [vmem:[#allocation2 + $0x98] sm:$0xff]
    %v812 = vld [vmem:[#allocation2 + $0xa0] sm:$0xff]
    %v813 = vld [vmem:[#allocation2 + $0xa8] sm:$0xff]
    %v814 = vld [vmem:[#allocation2 + $0xb0] sm:$0xff]
    %v815 = vld [vmem:[#allocation2 + $0xb8] sm:$0xff]
    %v816 = vld [vmem:[#allocation2 + $0xc0] sm:$0xff]
    %v817 = vld [vmem:[#allocation2 + $0xc8] sm:$0xff]
    %v818 = vld [vmem:[#allocation2 + $0xd0] sm:$0xff]
    %v819 = vld [vmem:[#allocation2 + $0xd8] sm:$0xff]
    %v820 = vld [vmem:[#allocation2 + $0xe0] sm:$0xff]
    %v821 = vld [vmem:[#allocation2 + $0xe8] sm:$0xff]
    %v822 = vld [vmem:[#allocation2 + $0xf0] sm:$0xff]
    %v823 = vld [vmem:[#allocation2 + $0xf8] sm:$0xff]
    %v824 = vld [vmem:[#allocation2 + $0x100] sm:$0xff]
    %v825 = vld [vmem:[#allocation2 + $0x108] sm:$0xff]
    %v826 = vld [vmem:[#allocation2 + $0x110] sm:$0xff]
    %v827 = vld [vmem:[#allocation2 + $0x118] sm:$0xff]
    %v828 = vld [vmem:[#allocation2 + $0x120] sm:$0xff]
    %v829 = vld [vmem:[#allocation2 + $0x128] sm:$0xff]
    %v830 = vld [vmem:[#allocation2 + $0x130] sm:$0xff]
    %v831 = vld [vmem:[#allocation2 + $0x138] sm:$0xff]
    %v832 = vld [vmem:[#allocation2 + $0x140] sm:$0xff]
    %v833 = vld [vmem:[#allocation2 + $0x148] sm:$0xff]
    %v834 = vld [vmem:[#allocation2 + $0x150] sm:$0xff]
    %v835 = vld [vmem:[#allocation2 + $0x158] sm:$0xff]
    %v836 = vld [vmem:[#allocation2 + $0x160] sm:$0xff]
    %v837 = vld [vmem:[#allocation2 + $0x168] sm:$0xff]
    %v838 = vld [vmem:[#allocation2 + $0x170] sm:$0xff]
    %v839 = vld [vmem:[#allocation2 + $0x178] sm:$0xff]
    %v840 = vld [vmem:[#allocation2 + $0x180] sm:$0xff]
    %v841 = vld [vmem:[#allocation2 + $0x188] sm:$0xff]
    %v842 = vld [vmem:[#allocation2 + $0x190] sm:$0xff]
    %v843 = vld [vmem:[#allocation2 + $0x198] sm:$0xff]
    %v844 = vld [vmem:[#allocation2 + $0x1a0] sm:$0xff]
    %v845 = vld [vmem:[#allocation2 + $0x1a8] sm:$0xff]
    %v846 = vld [vmem:[#allocation2 + $0x1b0] sm:$0xff]
    %v847 = vld [vmem:[#allocation2 + $0x1b8] sm:$0xff]
    %v848 = vld [vmem:[#allocation2 + $0x1c0] sm:$0xff]
    %v849 = vld [vmem:[#allocation2 + $0x1c8] sm:$0xff]
    %v850 = vld [vmem:[#allocation2 + $0x1d0] sm:$0xff]
    %v851 = vld [vmem:[#allocation2 + $0x1d8] sm:$0xff]
    %v852 = vld [vmem:[#allocation2 + $0x1e0] sm:$0xff]
    %v853 = vld [vmem:[#allocation2 + $0x1e8] sm:$0xff]
    %v854 = vld [vmem:[#allocation2 + $0x1f0] sm:$0xff]
    %v855 = vld [vmem:[#allocation2 + $0x1f8] sm:$0xff]
    %v856 = vld [vmem:[#allocation2 + $0x200] sm:$0xff]
    %v857 = vld [vmem:[#allocation2 + $0x208] sm:$0xff]
    %v858 = vld [vmem:[#allocation2 + $0x210] sm:$0xff]
    %v859 = vld [vmem:[#allocation2 + $0x218] sm:$0xff]
    %v860 = vld [vmem:[#allocation2 + $0x220] sm:$0xff]
    %v861 = vld [vmem:[#allocation2 + $0x228] sm:$0xff]
    %v862 = vld [vmem:[#allocation2 + $0x230] sm:$0xff]
    %v863 = vld [vmem:[#allocation2 + $0x238] sm:$0xff]
    %v864 = vld [vmem:[#allocation2 + $0x240] sm:$0xff]
    %v865 = vld [vmem:[#allocation2 + $0x248] sm:$0xff]
    %v866 = vld [vmem:[#allocation2 + $0x250] sm:$0xff]
    %v867 = vld [vmem:[#allocation2 + $0x258] sm:$0xff]
    %v868 = vld [vmem:[#allocation2 + $0x260] sm:$0xff]
    %v869 = vld [vmem:[#allocation2 + $0x268] sm:$0xff]
    %v870 = vld [vmem:[#allocation2 + $0x270] sm:$0xff]
    %v871 = vld [vmem:[#allocation2 + $0x278] sm:$0xff]
    %v872 = vld [vmem:[#allocation2 + $0x280] sm:$0xff]
    %v873 = vld [vmem:[#allocation2 + $0x288] sm:$0xff]
    %v874 = vld [vmem:[#allocation2 + $0x290] sm:$0xff]
    %v875 = vld [vmem:[#allocation2 + $0x298] sm:$0xff]
    %v876 = vld [vmem:[#allocation2 + $0x2a0] sm:$0xff]
    %v877 = vld [vmem:[#allocation2 + $0x2a8] sm:$0xff]
    %v878 = vld [vmem:[#allocation2 + $0x2b0] sm:$0xff]
    %v879 = vld [vmem:[#allocation2 + $0x2b8] sm:$0xff]
    %v880 = vld [vmem:[#allocation2 + $0x2c0] sm:$0xff]
    %v881 = vld [vmem:[#allocation2 + $0x2c8] sm:$0xff]
    %v882 = vld [vmem:[#allocation2 + $0x2d0] sm:$0xff]
    %v883 = vld [vmem:[#allocation2 + $0x2d8] sm:$0xff]
    %v884 = vld [vmem:[#allocation2 + $0x2e0] sm:$0xff]
    %v885 = vld [vmem:[#allocation2 + $0x2e8] sm:$0xff]
    %v886 = vld [vmem:[#allocation2 + $0x2f0] sm:$0xff]
    %v887 = vld [vmem:[#allocation2 + $0x2f8] sm:$0xff]
    %v888 = vld [vmem:[#allocation2 + $0x300] sm:$0xff]
    %v889 = vld [vmem:[#allocation2 + $0x308] sm:$0xff]
    %v890 = vld [vmem:[#allocation2 + $0x310] sm:$0xff]
    %v891 = vld [vmem:[#allocation2 + $0x318] sm:$0xff]
    %v892 = vld [vmem:[#allocation2 + $0x320] sm:$0xff]
    %v893 = vld [vmem:[#allocation2 + $0x328] sm:$0xff]
    %v894 = vld [vmem:[#allocation2 + $0x330] sm:$0xff]
    %v895 = vld [vmem:[#allocation2 + $0x338] sm:$0xff]
    %v896 = vld [vmem:[#allocation2 + $0x340] sm:$0xff]
    %v897 = vld [vmem:[#allocation2 + $0x348] sm:$0xff]
    %v898 = vld [vmem:[#allocation2 + $0x350] sm:$0xff]
    %v899 = vld [vmem:[#allocation2 + $0x358] sm:$0xff]
    %v900 = vld [vmem:[#allocation2 + $0x360] sm:$0xff]
    %v901 = vld [vmem:[#allocation2 + $0x368] sm:$0xff]
    %v902 = vld [vmem:[#allocation2 + $0x370] sm:$0xff]
    %v903 = vld [vmem:[#allocation2 + $0x378] sm:$0xff]
    %v904 = vld [vmem:[#allocation2 + $0x380] sm:$0xff]
    %v905 = vld [vmem:[#allocation2 + $0x388] sm:$0xff]
    %v906 = vld [vmem:[#allocation2 + $0x390] sm:$0xff]
    %v907 = vld [vmem:[#allocation2 + $0x398] sm:$0xff]
    %v908 = vld [vmem:[#allocation2 + $0x3a0] sm:$0xff]
    %v909 = vld [vmem:[#allocation2 + $0x3a8] sm:$0xff]
    %v910 = vld [vmem:[#allocation2 + $0x3b0] sm:$0xff]
    %v911 = vld [vmem:[#allocation2 + $0x3b8] sm:$0xff]
    %v912 = vld [vmem:[#allocation2 + $0x3c0] sm:$0xff]
    %v913 = vld [vmem:[#allocation2 + $0x3c8] sm:$0xff]
    %v914 = vld [vmem:[#allocation2 + $0x3d0] sm:$0xff]
    %v915 = vld [vmem:[#allocation2 + $0x3d8] sm:$0xff]
    %v916 = vld [vmem:[#allocation2 + $0x3e0] sm:$0xff]
    %v917 = vld [vmem:[#allocation2 + $0x3e8] sm:$0xff]
    %v918 = vld [vmem:[#allocation2 + $0x3f0] sm:$0xff]
    %v919 = vld [vmem:[#allocation2 + $0x3f8] sm:$0xff]
    %v920 = vpack.c.bf16 %v780, %v780
    %v921 = vpack.c.bf16 %v781, %v781
    %v922 = vpack.c.bf16 %v782, %v782
    %v923 = vpack.c.bf16 %v783, %v783
    %v924 = vpack.c.bf16 %v784, %v784
    %v925 = vpack.c.bf16 %v785, %v785
    %v926 = vpack.c.bf16 %v786, %v786
    %v927 = vpack.c.bf16 %v787, %v787
    %v928 = vunpack.c.l.s8.bf16 %v792
    %v929 = vunpack.c.l.s8.bf16 %v793
    %v930 = vunpack.c.l.s8.bf16 %v794
    %v931 = vunpack.c.l.s8.bf16 %v795
    %v932 = vunpack.c.h.s8.bf16 %v792
    %v933 = vunpack.c.h.s8.bf16 %v793
    %v934 = vunpack.c.h.s8.bf16 %v794
    %v935 = vunpack.c.h.s8.bf16 %v795
    %v936 = vunpack.c.l.s8.bf16 %v796
    %v937 = vunpack.c.l.s8.bf16 %v797
    %v938 = vunpack.c.l.s8.bf16 %v798
    %v939 = vunpack.c.l.s8.bf16 %v799
    %v940 = vunpack.c.h.s8.bf16 %v796
    %v941 = vunpack.c.h.s8.bf16 %v797
    %v942 = vunpack.c.h.s8.bf16 %v798
    %v943 = vunpack.c.h.s8.bf16 %v799
    %v944 = vunpack.c.l.s8.bf16 %v800
    %v945 = vunpack.c.l.s8.bf16 %v801
    %v946 = vunpack.c.l.s8.bf16 %v802
    %v947 = vunpack.c.l.s8.bf16 %v803
    %v948 = vunpack.c.h.s8.bf16 %v800
    %v949 = vunpack.c.h.s8.bf16 %v801
    %v950 = vunpack.c.h.s8.bf16 %v802
    %v951 = vunpack.c.h.s8.bf16 %v803
    %v952 = vunpack.c.l.s8.bf16 %v804
    %v953 = vunpack.c.l.s8.bf16 %v805
    %v954 = vunpack.c.l.s8.bf16 %v806
    %v955 = vunpack.c.l.s8.bf16 %v807
    %v956 = vunpack.c.h.s8.bf16 %v804
    %v957 = vunpack.c.h.s8.bf16 %v805
    %v958 = vunpack.c.h.s8.bf16 %v806
    %v959 = vunpack.c.h.s8.bf16 %v807
    %v960 = vunpack.c.l.s8.bf16 %v808
    %v961 = vunpack.c.l.s8.bf16 %v809
    %v962 = vunpack.c.l.s8.bf16 %v810
    %v963 = vunpack.c.l.s8.bf16 %v811
    %v964 = vunpack.c.h.s8.bf16 %v808
    %v965 = vunpack.c.h.s8.bf16 %v809
    %v966 = vunpack.c.h.s8.bf16 %v810
    %v967 = vunpack.c.h.s8.bf16 %v811
    %v968 = vunpack.c.l.s8.bf16 %v812
    %v969 = vunpack.c.l.s8.bf16 %v813
    %v970 = vunpack.c.l.s8.bf16 %v814
    %v971 = vunpack.c.l.s8.bf16 %v815
    %v972 = vunpack.c.h.s8.bf16 %v812
    %v973 = vunpack.c.h.s8.bf16 %v813
    %v974 = vunpack.c.h.s8.bf16 %v814
    %v975 = vunpack.c.h.s8.bf16 %v815
    %v976 = vunpack.c.l.s8.bf16 %v816
    %v977 = vunpack.c.l.s8.bf16 %v817
    %v978 = vunpack.c.l.s8.bf16 %v818
    %v979 = vunpack.c.l.s8.bf16 %v819
    %v980 = vunpack.c.h.s8.bf16 %v816
    %v981 = vunpack.c.h.s8.bf16 %v817
    %v982 = vunpack.c.h.s8.bf16 %v818
    %v983 = vunpack.c.h.s8.bf16 %v819
    %v984 = vunpack.c.l.s8.bf16 %v820
    %v985 = vunpack.c.l.s8.bf16 %v821
    %v986 = vunpack.c.l.s8.bf16 %v822
    %v987 = vunpack.c.l.s8.bf16 %v823
    %v988 = vunpack.c.h.s8.bf16 %v820
    %v989 = vunpack.c.h.s8.bf16 %v821
    %v990 = vunpack.c.h.s8.bf16 %v822
    %v991 = vunpack.c.h.s8.bf16 %v823
    %v992 = vunpack.c.l.s8.bf16 %v824
    %v993 = vunpack.c.l.s8.bf16 %v825
    %v994 = vunpack.c.l.s8.bf16 %v826
    %v995 = vunpack.c.l.s8.bf16 %v827
    %v996 = vunpack.c.h.s8.bf16 %v824
    %v997 = vunpack.c.h.s8.bf16 %v825
    %v998 = vunpack.c.h.s8.bf16 %v826
    %v999 = vunpack.c.h.s8.bf16 %v827
    %v1000 = vunpack.c.l.s8.bf16 %v828
    %v1001 = vunpack.c.l.s8.bf16 %v829
    %v1002 = vunpack.c.l.s8.bf16 %v830
    %v1003 = vunpack.c.l.s8.bf16 %v831
    %v1004 = vunpack.c.h.s8.bf16 %v828
    %v1005 = vunpack.c.h.s8.bf16 %v829
    %v1006 = vunpack.c.h.s8.bf16 %v830
    %v1007 = vunpack.c.h.s8.bf16 %v831
    %v1008 = vunpack.c.l.s8.bf16 %v832
    %v1009 = vunpack.c.l.s8.bf16 %v833
    %v1010 = vunpack.c.l.s8.bf16 %v834
    %v1011 = vunpack.c.l.s8.bf16 %v835
    %v1012 = vunpack.c.h.s8.bf16 %v832
    %v1013 = vunpack.c.h.s8.bf16 %v833
    %v1014 = vunpack.c.h.s8.bf16 %v834
    %v1015 = vunpack.c.h.s8.bf16 %v835
    %v1016 = vunpack.c.l.s8.bf16 %v836
    %v1017 = vunpack.c.l.s8.bf16 %v837
    %v1018 = vunpack.c.l.s8.bf16 %v838
    %v1019 = vunpack.c.l.s8.bf16 %v839
    %v1020 = vunpack.c.h.s8.bf16 %v836
    %v1021 = vunpack.c.h.s8.bf16 %v837
    %v1022 = vunpack.c.h.s8.bf16 %v838
    %v1023 = vunpack.c.h.s8.bf16 %v839
    %v1024 = vunpack.c.l.s8.bf16 %v840
    %v1025 = vunpack.c.l.s8.bf16 %v841
    %v1026 = vunpack.c.l.s8.bf16 %v842
    %v1027 = vunpack.c.l.s8.bf16 %v843
    %v1028 = vunpack.c.h.s8.bf16 %v840
    %v1029 = vunpack.c.h.s8.bf16 %v841
    %v1030 = vunpack.c.h.s8.bf16 %v842
    %v1031 = vunpack.c.h.s8.bf16 %v843
    %v1032 = vunpack.c.l.s8.bf16 %v844
    %v1033 = vunpack.c.l.s8.bf16 %v845
    %v1034 = vunpack.c.l.s8.bf16 %v846
    %v1035 = vunpack.c.l.s8.bf16 %v847
    %v1036 = vunpack.c.h.s8.bf16 %v844
    %v1037 = vunpack.c.h.s8.bf16 %v845
    %v1038 = vunpack.c.h.s8.bf16 %v846
    %v1039 = vunpack.c.h.s8.bf16 %v847
    %v1040 = vunpack.c.l.s8.bf16 %v848
    %v1041 = vunpack.c.l.s8.bf16 %v849
    %v1042 = vunpack.c.l.s8.bf16 %v850
    %v1043 = vunpack.c.l.s8.bf16 %v851
    %v1044 = vunpack.c.h.s8.bf16 %v848
    %v1045 = vunpack.c.h.s8.bf16 %v849
    %v1046 = vunpack.c.h.s8.bf16 %v850
    %v1047 = vunpack.c.h.s8.bf16 %v851
    %v1048 = vunpack.c.l.s8.bf16 %v852
    %v1049 = vunpack.c.l.s8.bf16 %v853
    %v1050 = vunpack.c.l.s8.bf16 %v854
    %v1051 = vunpack.c.l.s8.bf16 %v855
    %v1052 = vunpack.c.h.s8.bf16 %v852
    %v1053 = vunpack.c.h.s8.bf16 %v853
    %v1054 = vunpack.c.h.s8.bf16 %v854
    %v1055 = vunpack.c.h.s8.bf16 %v855
    %v1056 = vunpack.c.l.s8.bf16 %v856
    %v1057 = vunpack.c.l.s8.bf16 %v857
    %v1058 = vunpack.c.l.s8.bf16 %v858
    %v1059 = vunpack.c.l.s8.bf16 %v859
    %v1060 = vunpack.c.h.s8.bf16 %v856
    %v1061 = vunpack.c.h.s8.bf16 %v857
    %v1062 = vunpack.c.h.s8.bf16 %v858
    %v1063 = vunpack.c.h.s8.bf16 %v859
    %v1064 = vunpack.c.l.s8.bf16 %v860
    %v1065 = vunpack.c.l.s8.bf16 %v861
    %v1066 = vunpack.c.l.s8.bf16 %v862
    %v1067 = vunpack.c.l.s8.bf16 %v863
    %v1068 = vunpack.c.h.s8.bf16 %v860
    %v1069 = vunpack.c.h.s8.bf16 %v861
    %v1070 = vunpack.c.h.s8.bf16 %v862
    %v1071 = vunpack.c.h.s8.bf16 %v863
    %v1072 = vunpack.c.l.s8.bf16 %v864
    %v1073 = vunpack.c.l.s8.bf16 %v865
    %v1074 = vunpack.c.l.s8.bf16 %v866
    %v1075 = vunpack.c.l.s8.bf16 %v867
    %v1076 = vunpack.c.h.s8.bf16 %v864
    %v1077 = vunpack.c.h.s8.bf16 %v865
    %v1078 = vunpack.c.h.s8.bf16 %v866
    %v1079 = vunpack.c.h.s8.bf16 %v867
    %v1080 = vunpack.c.l.s8.bf16 %v868
    %v1081 = vunpack.c.l.s8.bf16 %v869
    %v1082 = vunpack.c.l.s8.bf16 %v870
    %v1083 = vunpack.c.l.s8.bf16 %v871
    %v1084 = vunpack.c.h.s8.bf16 %v868
    %v1085 = vunpack.c.h.s8.bf16 %v869
    %v1086 = vunpack.c.h.s8.bf16 %v870
    %v1087 = vunpack.c.h.s8.bf16 %v871
    %v1088 = vunpack.c.l.s8.bf16 %v872
    %v1089 = vunpack.c.l.s8.bf16 %v873
    %v1090 = vunpack.c.l.s8.bf16 %v874
    %v1091 = vunpack.c.l.s8.bf16 %v875
    %v1092 = vunpack.c.h.s8.bf16 %v872
    %v1093 = vunpack.c.h.s8.bf16 %v873
    %v1094 = vunpack.c.h.s8.bf16 %v874
    %v1095 = vunpack.c.h.s8.bf16 %v875
    %v1096 = vunpack.c.l.s8.bf16 %v876
    %v1097 = vunpack.c.l.s8.bf16 %v877
    %v1098 = vunpack.c.l.s8.bf16 %v878
    %v1099 = vunpack.c.l.s8.bf16 %v879
    %v1100 = vunpack.c.h.s8.bf16 %v876
    %v1101 = vunpack.c.h.s8.bf16 %v877
    %v1102 = vunpack.c.h.s8.bf16 %v878
    %v1103 = vunpack.c.h.s8.bf16 %v879
    %v1104 = vunpack.c.l.s8.bf16 %v880
    %v1105 = vunpack.c.l.s8.bf16 %v881
    %v1106 = vunpack.c.l.s8.bf16 %v882
    %v1107 = vunpack.c.l.s8.bf16 %v883
    %v1108 = vunpack.c.h.s8.bf16 %v880
    %v1109 = vunpack.c.h.s8.bf16 %v881
    %v1110 = vunpack.c.h.s8.bf16 %v882
    %v1111 = vunpack.c.h.s8.bf16 %v883
    %v1112 = vunpack.c.l.s8.bf16 %v884
    %v1113 = vunpack.c.l.s8.bf16 %v885
    %v1114 = vunpack.c.l.s8.bf16 %v886
    %v1115 = vunpack.c.l.s8.bf16 %v887
    %v1116 = vunpack.c.h.s8.bf16 %v884
    %v1117 = vunpack.c.h.s8.bf16 %v885
    %v1118 = vunpack.c.h.s8.bf16 %v886
    %v1119 = vunpack.c.h.s8.bf16 %v887
    %v1120 = vunpack.c.l.s8.bf16 %v888
    %v1121 = vunpack.c.l.s8.bf16 %v889
    %v1122 = vunpack.c.l.s8.bf16 %v890
    %v1123 = vunpack.c.l.s8.bf16 %v891
    %v1124 = vunpack.c.h.s8.bf16 %v888
    %v1125 = vunpack.c.h.s8.bf16 %v889
    %v1126 = vunpack.c.h.s8.bf16 %v890
    %v1127 = vunpack.c.h.s8.bf16 %v891
    %v1128 = vunpack.c.l.s8.bf16 %v892
    %v1129 = vunpack.c.l.s8.bf16 %v893
    %v1130 = vunpack.c.l.s8.bf16 %v894
    %v1131 = vunpack.c.l.s8.bf16 %v895
    %v1132 = vunpack.c.h.s8.bf16 %v892
    %v1133 = vunpack.c.h.s8.bf16 %v893
    %v1134 = vunpack.c.h.s8.bf16 %v894
    %v1135 = vunpack.c.h.s8.bf16 %v895
    %v1136 = vunpack.c.l.s8.bf16 %v896
    %v1137 = vunpack.c.l.s8.bf16 %v897
    %v1138 = vunpack.c.l.s8.bf16 %v898
    %v1139 = vunpack.c.l.s8.bf16 %v899
    %v1140 = vunpack.c.h.s8.bf16 %v896
    %v1141 = vunpack.c.h.s8.bf16 %v897
    %v1142 = vunpack.c.h.s8.bf16 %v898
    %v1143 = vunpack.c.h.s8.bf16 %v899
    %v1144 = vunpack.c.l.s8.bf16 %v900
    %v1145 = vunpack.c.l.s8.bf16 %v901
    %v1146 = vunpack.c.l.s8.bf16 %v902
    %v1147 = vunpack.c.l.s8.bf16 %v903
    %v1148 = vunpack.c.h.s8.bf16 %v900
    %v1149 = vunpack.c.h.s8.bf16 %v901
    %v1150 = vunpack.c.h.s8.bf16 %v902
    %v1151 = vunpack.c.h.s8.bf16 %v903
    %v1152 = vunpack.c.l.s8.bf16 %v904
    %v1153 = vunpack.c.l.s8.bf16 %v905
    %v1154 = vunpack.c.l.s8.bf16 %v906
    %v1155 = vunpack.c.l.s8.bf16 %v907
    %v1156 = vunpack.c.h.s8.bf16 %v904
    %v1157 = vunpack.c.h.s8.bf16 %v905
    %v1158 = vunpack.c.h.s8.bf16 %v906
    %v1159 = vunpack.c.h.s8.bf16 %v907
    %v1160 = vunpack.c.l.s8.bf16 %v908
    %v1161 = vunpack.c.l.s8.bf16 %v909
    %v1162 = vunpack.c.l.s8.bf16 %v910
    %v1163 = vunpack.c.l.s8.bf16 %v911
    %v1164 = vunpack.c.h.s8.bf16 %v908
    %v1165 = vunpack.c.h.s8.bf16 %v909
    %v1166 = vunpack.c.h.s8.bf16 %v910
    %v1167 = vunpack.c.h.s8.bf16 %v911
    %v1168 = vunpack.c.l.s8.bf16 %v912
    %v1169 = vunpack.c.l.s8.bf16 %v913
    %v1170 = vunpack.c.l.s8.bf16 %v914
    %v1171 = vunpack.c.l.s8.bf16 %v915
    %v1172 = vunpack.c.h.s8.bf16 %v912
    %v1173 = vunpack.c.h.s8.bf16 %v913
    %v1174 = vunpack.c.h.s8.bf16 %v914
    %v1175 = vunpack.c.h.s8.bf16 %v915
    %v1176 = vunpack.c.l.s8.bf16 %v916
    %v1177 = vunpack.c.l.s8.bf16 %v917
    %v1178 = vunpack.c.l.s8.bf16 %v918
    %v1179 = vunpack.c.l.s8.bf16 %v919
    %v1180 = vunpack.c.h.s8.bf16 %v916
    %v1181 = vunpack.c.h.s8.bf16 %v917
    %v1182 = vunpack.c.h.s8.bf16 %v918
    %v1183 = vunpack.c.h.s8.bf16 %v919
    %1184 = vmatprep.subr.bf16.mxu0 %v929
    %1185 = vmatpush1.bf16.msra.mxu0 %v928
    %1186 = vmatprep.subr.bf16.mxu0 %v933
    %1187 = vmatpush1.bf16.msra.mxu0 %v932
    %1188 = vmatprep.subr.bf16.mxu0 %v937
    %1189 = vmatpush1.bf16.msra.mxu0 %v936
    %1190 = vmatprep.subr.bf16.mxu0 %v941
    %1191 = vmatpush1.bf16.msra.mxu0 %v940
    %1192 = vmatprep.subr.bf16.mxu0 %v945
    %1193 = vmatpush1.bf16.msra.mxu0 %v944
    %1194 = vmatprep.subr.bf16.mxu0 %v949
    %1195 = vmatpush1.bf16.msra.mxu0 %v948
    %1196 = vmatprep.subr.bf16.mxu0 %v953
    %1197 = vmatpush1.bf16.msra.mxu0 %v952
    %1198 = vmatprep.subr.bf16.mxu0 %v957
    %1199 = vmatpush1.bf16.msra.mxu0 %v956
    %1200 = vmatprep.subr.bf16.mxu0 %v961
    %1201 = vmatpush1.bf16.msra.mxu0 %v960
    %1202 = vmatprep.subr.bf16.mxu0 %v965
    %1203 = vmatpush1.bf16.msra.mxu0 %v964
    %1204 = vmatprep.subr.bf16.mxu0 %v969
    %1205 = vmatpush1.bf16.msra.mxu0 %v968
    %1206 = vmatprep.subr.bf16.mxu0 %v973
    %1207 = vmatpush1.bf16.msra.mxu0 %v972
    %1208 = vmatprep.subr.bf16.mxu0 %v977
    %1209 = vmatpush1.bf16.msra.mxu0 %v976
    %1210 = vmatprep.subr.bf16.mxu0 %v981
    %1211 = vmatpush1.bf16.msra.mxu0 %v980
    %1212 = vmatprep.subr.bf16.mxu0 %v985
    %1213 = vmatpush1.bf16.msra.mxu0 %v984
    %1214 = vmatprep.subr.bf16.mxu0 %v989
    %1215 = vmatpush1.bf16.msra.mxu0 %v988
    %1216 = vmatprep.mubr.bf16.mxu0 %v921
    %1217 = vmatmul.mubr.bf16.gmra.mrb[0].mxu0 %v920
    %v1218 = vpop.f32.mrb[0].mxu0
    %v1219 = vadd.f32 0.0, %v1218
    %v1220 = vpop.f32.mrb[0].mxu0
    %v1221 = vadd.f32 0.0, %v1220
    %v1222 = vpop.f32.mrb[0].mxu0
    %v1223 = vpop.f32.mrb[0].mxu0
    %1224 = vdwg.mxu0
    %1225 = vmatprep.subr.bf16.mxu0 %v993
    %1226 = vmatpush1.bf16.msra.mxu0 %v992
    %1227 = vmatprep.subr.bf16.mxu0 %v997
    %1228 = vmatpush1.bf16.msra.mxu0 %v996
    %1229 = vmatprep.subr.bf16.mxu0 %v1001
    %1230 = vmatpush1.bf16.msra.mxu0 %v1000
    %1231 = vmatprep.subr.bf16.mxu0 %v1005
    %1232 = vmatpush1.bf16.msra.mxu0 %v1004
    %1233 = vmatprep.subr.bf16.mxu0 %v1009
    %1234 = vmatpush1.bf16.msra.mxu0 %v1008
    %1235 = vmatprep.subr.bf16.mxu0 %v1013
    %1236 = vmatpush1.bf16.msra.mxu0 %v1012
    %1237 = vmatprep.subr.bf16.mxu0 %v1017
    %1238 = vmatpush1.bf16.msra.mxu0 %v1016
    %1239 = vmatprep.subr.bf16.mxu0 %v1021
    %1240 = vmatpush1.bf16.msra.mxu0 %v1020
    %1241 = vmatprep.subr.bf16.mxu0 %v1025
    %1242 = vmatpush1.bf16.msra.mxu0 %v1024
    %1243 = vmatprep.subr.bf16.mxu0 %v1029
    %1244 = vmatpush1.bf16.msra.mxu0 %v1028
    %1245 = vmatprep.subr.bf16.mxu0 %v1033
    %1246 = vmatpush1.bf16.msra.mxu0 %v1032
    %1247 = vmatprep.subr.bf16.mxu0 %v1037
    %1248 = vmatpush1.bf16.msra.mxu0 %v1036
    %1249 = vmatprep.subr.bf16.mxu0 %v1041
    %1250 = vmatpush1.bf16.msra.mxu0 %v1040
    %1251 = vmatprep.subr.bf16.mxu0 %v1045
    %1252 = vmatpush1.bf16.msra.mxu0 %v1044
    %1253 = vmatprep.subr.bf16.mxu0 %v1049
    %1254 = vmatpush1.bf16.msra.mxu0 %v1048
    %1255 = vmatprep.subr.bf16.mxu0 %v1053
    %1256 = vmatpush1.bf16.msra.mxu0 %v1052
    %1257 = vmatprep.mubr.bf16.mxu0 %v923
    %1258 = vmatmul.mubr.bf16.gmra.mrb[0].mxu0 %v922
    %v1259 = vpop.f32.mrb[0].mxu0
    %v1260 = vadd.f32 %v1219, %v1259
    %v1261 = vpop.f32.mrb[0].mxu0
    %v1262 = vadd.f32 %v1221, %v1261
    %v1263 = vpop.f32.mrb[0].mxu0
    %v1264 = vpop.f32.mrb[0].mxu0
    %1265 = vdwg.mxu0
    %1266 = vmatprep.subr.bf16.mxu0 %v1057
    %1267 = vmatpush1.bf16.msra.mxu0 %v1056
    %1268 = vmatprep.subr.bf16.mxu0 %v1061
    %1269 = vmatpush1.bf16.msra.mxu0 %v1060
    %1270 = vmatprep.subr.bf16.mxu0 %v1065
    %1271 = vmatpush1.bf16.msra.mxu0 %v1064
    %1272 = vmatprep.subr.bf16.mxu0 %v1069
    %1273 = vmatpush1.bf16.msra.mxu0 %v1068
    %1274 = vmatprep.subr.bf16.mxu0 %v1073
    %1275 = vmatpush1.bf16.msra.mxu0 %v1072
    %1276 = vmatprep.subr.bf16.mxu0 %v1077
    %1277 = vmatpush1.bf16.msra.mxu0 %v1076
    %1278 = vmatprep.subr.bf16.mxu0 %v1081
    %1279 = vmatpush1.bf16.msra.mxu0 %v1080
    %1280 = vmatprep.subr.bf16.mxu0 %v1085
    %1281 = vmatpush1.bf16.msra.mxu0 %v1084
    %1282 = vmatprep.subr.bf16.mxu0 %v1089
    %1283 = vmatpush1.bf16.msra.mxu0 %v1088
    %1284 = vmatprep.subr.bf16.mxu0 %v1093
    %1285 = vmatpush1.bf16.msra.mxu0 %v1092
    %1286 = vmatprep.subr.bf16.mxu0 %v1097
    %1287 = vmatpush1.bf16.msra.mxu0 %v1096
    %1288 = vmatprep.subr.bf16.mxu0 %v1101
    %1289 = vmatpush1.bf16.msra.mxu0 %v1100
    %1290 = vmatprep.subr.bf16.mxu0 %v1105
    %1291 = vmatpush1.bf16.msra.mxu0 %v1104
    %1292 = vmatprep.subr.bf16.mxu0 %v1109
    %1293 = vmatpush1.bf16.msra.mxu0 %v1108
    %1294 = vmatprep.subr.bf16.mxu0 %v1113
    %1295 = vmatpush1.bf16.msra.mxu0 %v1112
    %1296 = vmatprep.subr.bf16.mxu0 %v1117
    %1297 = vmatpush1.bf16.msra.mxu0 %v1116
    %1298 = vmatprep.mubr.bf16.mxu0 %v925
    %1299 = vmatmul.mubr.bf16.gmra.mrb[0].mxu0 %v924
    %v1300 = vpop.f32.mrb[0].mxu0
    %v1301 = vadd.f32 %v1260, %v1300
    %v1302 = vpop.f32.mrb[0].mxu0
    %v1303 = vadd.f32 %v1262, %v1302
    %v1304 = vpop.f32.mrb[0].mxu0
    %v1305 = vpop.f32.mrb[0].mxu0
    %1306 = vdwg.mxu0
    %1307 = vmatprep.subr.bf16.mxu0 %v1121
    %1308 = vmatpush1.bf16.msra.mxu0 %v1120
    %1309 = vmatprep.subr.bf16.mxu0 %v1125
    %1310 = vmatpush1.bf16.msra.mxu0 %v1124
    %1311 = vmatprep.subr.bf16.mxu0 %v1129
    %1312 = vmatpush1.bf16.msra.mxu0 %v1128
    %1313 = vmatprep.subr.bf16.mxu0 %v1133
    %1314 = vmatpush1.bf16.msra.mxu0 %v1132
    %1315 = vmatprep.subr.bf16.mxu0 %v1137
    %1316 = vmatpush1.bf16.msra.mxu0 %v1136
    %1317 = vmatprep.subr.bf16.mxu0 %v1141
    %1318 = vmatpush1.bf16.msra.mxu0 %v1140
    %1319 = vmatprep.subr.bf16.mxu0 %v1145
    %1320 = vmatpush1.bf16.msra.mxu0 %v1144
    %1321 = vmatprep.subr.bf16.mxu0 %v1149
    %1322 = vmatpush1.bf16.msra.mxu0 %v1148
    %1323 = vmatprep.subr.bf16.mxu0 %v1153
    %1324 = vmatpush1.bf16.msra.mxu0 %v1152
    %1325 = vmatprep.subr.bf16.mxu0 %v1157
    %1326 = vmatpush1.bf16.msra.mxu0 %v1156
    %1327 = vmatprep.subr.bf16.mxu0 %v1161
    %1328 = vmatpush1.bf16.msra.mxu0 %v1160
    %1329 = vmatprep.subr.bf16.mxu0 %v1165
    %1330 = vmatpush1.bf16.msra.mxu0 %v1164
    %1331 = vmatprep.subr.bf16.mxu0 %v1169
    %1332 = vmatpush1.bf16.msra.mxu0 %v1168
    %1333 = vmatprep.subr.bf16.mxu0 %v1173
    %1334 = vmatpush1.bf16.msra.mxu0 %v1172
    %1335 = vmatprep.subr.bf16.mxu0 %v1177
    %1336 = vmatpush1.bf16.msra.mxu0 %v1176
    %1337 = vmatprep.subr.bf16.mxu0 %v1181
    %1338 = vmatpush1.bf16.msra.mxu0 %v1180
    %1339 = vmatprep.mubr.bf16.mxu0 %v927
    %1340 = vmatmul.mubr.bf16.gmra.mrb[0].mxu0 %v926
    %v1341 = vpop.f32.mrb[0].mxu0
    %v1342 = vadd.f32 %v1301, %v1341
    %v1343 = vpop.f32.mrb[0].mxu0
    %v1344 = vadd.f32 %v1303, %v1343
    %v1345 = vpop.f32.mrb[0].mxu0
    %v1346 = vpop.f32.mrb[0].mxu0
    %1347 = vdwg.mxu0
    %1348 = vmatprep.subr.bf16.mxu0 %v931
    %1349 = vmatpush1.bf16.msra.mxu0 %v930
    %1350 = vmatprep.subr.bf16.mxu0 %v935
    %1351 = vmatpush1.bf16.msra.mxu0 %v934
    %1352 = vmatprep.subr.bf16.mxu0 %v939
    %1353 = vmatpush1.bf16.msra.mxu0 %v938
    %1354 = vmatprep.subr.bf16.mxu0 %v943
    %1355 = vmatpush1.bf16.msra.mxu0 %v942
    %1356 = vmatprep.subr.bf16.mxu0 %v947
    %1357 = vmatpush1.bf16.msra.mxu0 %v946
    %1358 = vmatprep.subr.bf16.mxu0 %v951
    %1359 = vmatpush1.bf16.msra.mxu0 %v950
    %1360 = vmatprep.subr.bf16.mxu0 %v955
    %1361 = vmatpush1.bf16.msra.mxu0 %v954
    %1362 = vmatprep.subr.bf16.mxu0 %v959
    %1363 = vmatpush1.bf16.msra.mxu0 %v958
    %1364 = vmatprep.subr.bf16.mxu0 %v963
    %1365 = vmatpush1.bf16.msra.mxu0 %v962
    %1366 = vmatprep.subr.bf16.mxu0 %v967
    %1367 = vmatpush1.bf16.msra.mxu0 %v966
    %1368 = vmatprep.subr.bf16.mxu0 %v971
    %1369 = vmatpush1.bf16.msra.mxu0 %v970
    %1370 = vmatprep.subr.bf16.mxu0 %v975
    %1371 = vmatpush1.bf16.msra.mxu0 %v974
    %1372 = vmatprep.subr.bf16.mxu0 %v979
    %1373 = vmatpush1.bf16.msra.mxu0 %v978
    %1374 = vmatprep.subr.bf16.mxu0 %v983
    %1375 = vmatpush1.bf16.msra.mxu0 %v982
    %1376 = vmatprep.subr.bf16.mxu0 %v987
    %1377 = vmatpush1.bf16.msra.mxu0 %v986
    %1378 = vmatprep.subr.bf16.mxu0 %v991
    %1379 = vmatpush1.bf16.msra.mxu0 %v990
    %1380 = vmatprep.mubr.bf16.mxu0 %v921
    %1381 = vmatmul.mubr.bf16.gmra.mrb[0].mxu0 %v920
    %v1382 = vpop.f32.mrb[0].mxu0
    %v1383 = vadd.f32 0.0, %v1382
    %v1384 = vpop.f32.mrb[0].mxu0
    %v1385 = vadd.f32 0.0, %v1384
    %v1386 = vpop.f32.mrb[0].mxu0
    %v1387 = vpop.f32.mrb[0].mxu0
    %1388 = vdwg.mxu0
    %1389 = vmatprep.subr.bf16.mxu0 %v995
    %1390 = vmatpush1.bf16.msra.mxu0 %v994
    %1391 = vmatprep.subr.bf16.mxu0 %v999
    %1392 = vmatpush1.bf16.msra.mxu0 %v998
    %1393 = vmatprep.subr.bf16.mxu0 %v1003
    %1394 = vmatpush1.bf16.msra.mxu0 %v1002
    %1395 = vmatprep.subr.bf16.mxu0 %v1007
    %1396 = vmatpush1.bf16.msra.mxu0 %v1006
    %1397 = vmatprep.subr.bf16.mxu0 %v1011
    %1398 = vmatpush1.bf16.msra.mxu0 %v1010
    %1399 = vmatprep.subr.bf16.mxu0 %v1015
    %1400 = vmatpush1.bf16.msra.mxu0 %v1014
    %1401 = vmatprep.subr.bf16.mxu0 %v1019
    %1402 = vmatpush1.bf16.msra.mxu0 %v1018
    %1403 = vmatprep.subr.bf16.mxu0 %v1023
    %1404 = vmatpush1.bf16.msra.mxu0 %v1022
    %1405 = vmatprep.subr.bf16.mxu0 %v1027
    %1406 = vmatpush1.bf16.msra.mxu0 %v1026
    %1407 = vmatprep.subr.bf16.mxu0 %v1031
    %1408 = vmatpush1.bf16.msra.mxu0 %v1030
    %1409 = vmatprep.subr.bf16.mxu0 %v1035
    %1410 = vmatpush1.bf16.msra.mxu0 %v1034
    %1411 = vmatprep.subr.bf16.mxu0 %v1039
    %1412 = vmatpush1.bf16.msra.mxu0 %v1038
    %1413 = vmatprep.subr.bf16.mxu0 %v1043
    %1414 = vmatpush1.bf16.msra.mxu0 %v1042
    %1415 = vmatprep.subr.bf16.mxu0 %v1047
    %1416 = vmatpush1.bf16.msra.mxu0 %v1046
    %1417 = vmatprep.subr.bf16.mxu0 %v1051
    %1418 = vmatpush1.bf16.msra.mxu0 %v1050
    %1419 = vmatprep.subr.bf16.mxu0 %v1055
    %1420 = vmatpush1.bf16.msra.mxu0 %v1054
    %1421 = vmatprep.mubr.bf16.mxu0 %v923
    %1422 = vmatmul.mubr.bf16.gmra.mrb[0].mxu0 %v922
    %v1423 = vpop.f32.mrb[0].mxu0
    %v1424 = vadd.f32 %v1383, %v1423
    %v1425 = vpop.f32.mrb[0].mxu0
    %v1426 = vadd.f32 %v1385, %v1425
    %v1427 = vpop.f32.mrb[0].mxu0
    %v1428 = vpop.f32.mrb[0].mxu0
    %1429 = vdwg.mxu0
    %1430 = vmatprep.subr.bf16.mxu0 %v1059
    %1431 = vmatpush1.bf16.msra.mxu0 %v1058
    %1432 = vmatprep.subr.bf16.mxu0 %v1063
    %1433 = vmatpush1.bf16.msra.mxu0 %v1062
    %1434 = vmatprep.subr.bf16.mxu0 %v1067
    %1435 = vmatpush1.bf16.msra.mxu0 %v1066
    %1436 = vmatprep.subr.bf16.mxu0 %v1071
    %1437 = vmatpush1.bf16.msra.mxu0 %v1070
    %1438 = vmatprep.subr.bf16.mxu0 %v1075
    %1439 = vmatpush1.bf16.msra.mxu0 %v1074
    %1440 = vmatprep.subr.bf16.mxu0 %v1079
    %1441 = vmatpush1.bf16.msra.mxu0 %v1078
    %1442 = vmatprep.subr.bf16.mxu0 %v1083
    %1443 = vmatpush1.bf16.msra.mxu0 %v1082
    %1444 = vmatprep.subr.bf16.mxu0 %v1087
    %1445 = vmatpush1.bf16.msra.mxu0 %v1086
    %1446 = vmatprep.subr.bf16.mxu0 %v1091
    %1447 = vmatpush1.bf16.msra.mxu0 %v1090
    %1448 = vmatprep.subr.bf16.mxu0 %v1095
    %1449 = vmatpush1.bf16.msra.mxu0 %v1094
    %1450 = vmatprep.subr.bf16.mxu0 %v1099
    %1451 = vmatpush1.bf16.msra.mxu0 %v1098
    %1452 = vmatprep.subr.bf16.mxu0 %v1103
    %1453 = vmatpush1.bf16.msra.mxu0 %v1102
    %1454 = vmatprep.subr.bf16.mxu0 %v1107
    %1455 = vmatpush1.bf16.msra.mxu0 %v1106
    %1456 = vmatprep.subr.bf16.mxu0 %v1111
    %1457 = vmatpush1.bf16.msra.mxu0 %v1110
    %1458 = vmatprep.subr.bf16.mxu0 %v1115
    %1459 = vmatpush1.bf16.msra.mxu0 %v1114
    %1460 = vmatprep.subr.bf16.mxu0 %v1119
    %1461 = vmatpush1.bf16.msra.mxu0 %v1118
    %1462 = vmatprep.mubr.bf16.mxu0 %v925
    %1463 = vmatmul.mubr.bf16.gmra.mrb[0].mxu0 %v924
    %v1464 = vpop.f32.mrb[0].mxu0
    %v1465 = vadd.f32 %v1424, %v1464
    %v1466 = vpop.f32.mrb[0].mxu0
    %v1467 = vadd.f32 %v1426, %v1466
    %v1468 = vpop.f32.mrb[0].mxu0
    %v1469 = vpop.f32.mrb[0].mxu0
    %1470 = vdwg.mxu0
    %1471 = vmatprep.subr.bf16.mxu0 %v1123
    %1472 = vmatpush1.bf16.msra.mxu0 %v1122
    %1473 = vmatprep.subr.bf16.mxu0 %v1127
    %1474 = vmatpush1.bf16.msra.mxu0 %v1126
    %1475 = vmatprep.subr.bf16.mxu0 %v1131
    %1476 = vmatpush1.bf16.msra.mxu0 %v1130
    %1477 = vmatprep.subr.bf16.mxu0 %v1135
    %1478 = vmatpush1.bf16.msra.mxu0 %v1134
    %1479 = vmatprep.subr.bf16.mxu0 %v1139
    %1480 = vmatpush1.bf16.msra.mxu0 %v1138
    %1481 = vmatprep.subr.bf16.mxu0 %v1143
    %1482 = vmatpush1.bf16.msra.mxu0 %v1142
    %1483 = vmatprep.subr.bf16.mxu0 %v1147
    %1484 = vmatpush1.bf16.msra.mxu0 %v1146
    %1485 = vmatprep.subr.bf16.mxu0 %v1151
    %1486 = vmatpush1.bf16.msra.mxu0 %v1150
    %1487 = vmatprep.subr.bf16.mxu0 %v1155
    %1488 = vmatpush1.bf16.msra.mxu0 %v1154
    %1489 = vmatprep.subr.bf16.mxu0 %v1159
    %1490 = vmatpush1.bf16.msra.mxu0 %v1158
    %1491 = vmatprep.subr.bf16.mxu0 %v1163
    %1492 = vmatpush1.bf16.msra.mxu0 %v1162
    %1493 = vmatprep.subr.bf16.mxu0 %v1167
    %1494 = vmatpush1.bf16.msra.mxu0 %v1166
    %1495 = vmatprep.subr.bf16.mxu0 %v1171
    %1496 = vmatpush1.bf16.msra.mxu0 %v1170
    %1497 = vmatprep.subr.bf16.mxu0 %v1175
    %1498 = vmatpush1.bf16.msra.mxu0 %v1174
    %1499 = vmatprep.subr.bf16.mxu0 %v1179
    %1500 = vmatpush1.bf16.msra.mxu0 %v1178
    %1501 = vmatprep.subr.bf16.mxu0 %v1183
    %1502 = vmatpush1.bf16.msra.mxu0 %v1182
    %1503 = vmatprep.mubr.bf16.mxu0 %v927
    %1504 = vmatmul.mubr.bf16.gmra.mrb[0].mxu0 %v926
    %v1505 = vpop.f32.mrb[0].mxu0
    %v1506 = vadd.f32 %v1465, %v1505
    %v1507 = vpop.f32.mrb[0].mxu0
    %v1508 = vadd.f32 %v1467, %v1507
    %v1509 = vpop.f32.mrb[0].mxu0
    %v1510 = vpop.f32.mrb[0].mxu0
    %1511 = vdwg.mxu0
    %s1512 = scalar_lea.vmem [#allocation8], 68
    %v1513 = vld [vmem:[%s1512] ss:$8 sm:$0xf]
    %v1515 = vlaneseq
    %v1516 = vshrl.u32 %v1515, 7
    %v1517 = vsub.s32 0, %v1516
    %v1518 = vrot.slane %v1513, %v1517
    %v1519 = vlaneseq
    %v1520 = vshrl.u32 %v1519, 7
    %v1521 = vsub.s32 1, %v1520
    %v1522 = vrot.slane %v1513, %v1521
    %v1523 = vlaneseq
    %v1524 = vshrl.u32 %v1523, 7
    %v1525 = vsub.s32 2, %v1524
    %v1526 = vrot.slane %v1513, %v1525
    %v1527 = vlaneseq
    %v1528 = vshrl.u32 %v1527, 7
    %v1529 = vsub.s32 3, %v1528
    %v1530 = vrot.slane %v1513, %v1529
    %v1535 = vmul.f32 %v1342, %v1518
    %v1536 = vmul.f32 %v1344, %v1522
    %v1537 = vmul.f32 %v1506, %v1526
    %v1538 = vmul.f32 %v1508, %v1530
    %v1539 = vrot.slane %v1535, 4
    %v1540 = vadd.f32 %v1535, %v1539
    %v1541 = vrot.slane %v1540, 2
    %v1542 = vadd.f32 %v1540, %v1541
    %v1543 = vrot.slane %v1542, 1
    %v1544 = vadd.f32 %v1542, %v1543
    %v1545 = vrot.slane %v1536, 4
    %v1546 = vadd.f32 %v1536, %v1545
    %v1547 = vrot.slane %v1546, 2
    %v1548 = vadd.f32 %v1546, %v1547
    %v1549 = vrot.slane %v1548, 1
    %v1550 = vadd.f32 %v1548, %v1549
    %v1551 = vrot.slane %v1537, 4
    %v1552 = vadd.f32 %v1537, %v1551
    %v1553 = vrot.slane %v1552, 2
    %v1554 = vadd.f32 %v1552, %v1553
    %v1555 = vrot.slane %v1554, 1
    %v1556 = vadd.f32 %v1554, %v1555
    %v1557 = vrot.slane %v1538, 4
    %v1558 = vadd.f32 %v1538, %v1557
    %v1559 = vrot.slane %v1558, 2
    %v1560 = vadd.f32 %v1558, %v1559
    %v1561 = vrot.slane %v1560, 1
    %v1562 = vadd.f32 %v1560, %v1561
    %v1563 = vmul.f32 %v1544, %v452
    %v1564 = vmul.f32 %v1550, %v452
    %v1565 = vmul.f32 %v1556, %v452
    %v1566 = vmul.f32 %v1562, %v452
    %v1567 = vsub.f32 %v1535, %v1563
    %v1568 = vsub.f32 %v1536, %v1564
    %v1569 = vsub.f32 %v1537, %v1565
    %v1570 = vsub.f32 %v1538, %v1566
    %v1571 = vmul.f32 %v1567, %v1567
    %v1572 = vmul.f32 %v1568, %v1568
    %v1573 = vmul.f32 %v1569, %v1569
    %v1574 = vmul.f32 %v1570, %v1570
    %v1575 = vrot.slane %v1571, 4
    %v1576 = vadd.f32 %v1571, %v1575
    %v1577 = vrot.slane %v1576, 2
    %v1578 = vadd.f32 %v1576, %v1577
    %v1579 = vrot.slane %v1578, 1
    %v1580 = vadd.f32 %v1578, %v1579
    %v1581 = vrot.slane %v1572, 4
    %v1582 = vadd.f32 %v1572, %v1581
    %v1583 = vrot.slane %v1582, 2
    %v1584 = vadd.f32 %v1582, %v1583
    %v1585 = vrot.slane %v1584, 1
    %v1586 = vadd.f32 %v1584, %v1585
    %v1587 = vrot.slane %v1573, 4
    %v1588 = vadd.f32 %v1573, %v1587
    %v1589 = vrot.slane %v1588, 2
    %v1590 = vadd.f32 %v1588, %v1589
    %v1591 = vrot.slane %v1590, 1
    %v1592 = vadd.f32 %v1590, %v1591
    %v1593 = vrot.slane %v1574, 4
    %v1594 = vadd.f32 %v1574, %v1593
    %v1595 = vrot.slane %v1594, 2
    %v1596 = vadd.f32 %v1594, %v1595
    %v1597 = vrot.slane %v1596, 1
    %v1598 = vadd.f32 %v1596, %v1597
    %v1599 = vmul.f32 %v1580, %v452
    %v1600 = vmul.f32 %v1586, %v452
    %v1601 = vmul.f32 %v1592, %v452
    %v1602 = vmul.f32 %v1598, %v452
    %s1603 = scalar_lea.vmem [#allocation8], 2
    %v1604 = vld [vmem:[%s1603] ss:$8 sm:$0xf]
    %v1605 = vadd.f32 %v1599, 1e-05
    %v1606 = vadd.f32 %v1600, 1e-05
    %v1607 = vadd.f32 %v1601, 1e-05
    %v1608 = vadd.f32 %v1602, 1e-05
    %v1609 = vrsqrt.pop %v1605
    %v1610 = vrsqrt.pop %v1606
    %v1611 = vrsqrt.pop %v1607
    %v1612 = vrsqrt.pop %v1608
    %v1617 = vcombine.low %v1609, %v1610
    %v1618 = vcombine.low %v1611, %v1612
    %v1620 = vunpack.c.l.s4 1966171168
    %v1621 = vunpack.c.0.s8 %v1620
    %v1622 = vlaneseq
    %v1623 = vshrl.u32 %v1622, 7
    %v1624 = vsub.s32 %v1621, %v1623
    %v1625 = vrot.slane %v1617, %v1624
    %v1627 = vunpack.c.l.s4 1966171168
    %v1628 = vunpack.c.0.s8 %v1627
    %v1629 = vlaneseq
    %v1630 = vshrl.u32 %v1629, 7
    %v1631 = vsub.s32 %v1628, %v1630
    %v1632 = vrot.slane %v1618, %v1631
    %v1633 = vcombine.low %v1625, %v1632
    %v1635 = vunpack.c.l.s4 1966171168
    %v1636 = vunpack.c.0.s8 %v1635
    %v1637 = vlaneseq
    %v1638 = vshrl.u32 %v1637, 7
    %v1639 = vsub.s32 %v1636, %v1638
    %v1640 = vrot.slane %v1633, %v1639
    %v1642 = vmul.f32 %v1604, %v1640
    %s1643 = scalar_lea.vmem [#allocation8], 3
    %v1644 = vld [vmem:[%s1643] ss:$8 sm:$0xf]
    %v1646 = vlaneseq
    %v1647 = vshrl.u32 %v1646, 7
    %v1648 = vsub.s32 0, %v1647
    %v1649 = vrot.slane %v1642, %v1648
    %v1650 = vlaneseq
    %v1651 = vshrl.u32 %v1650, 7
    %v1652 = vsub.s32 1, %v1651
    %v1653 = vrot.slane %v1642, %v1652
    %v1654 = vlaneseq
    %v1655 = vshrl.u32 %v1654, 7
    %v1656 = vsub.s32 2, %v1655
    %v1657 = vrot.slane %v1642, %v1656
    %v1658 = vlaneseq
    %v1659 = vshrl.u32 %v1658, 7
    %v1660 = vsub.s32 3, %v1659
    %v1661 = vrot.slane %v1642, %v1660
    %v1666 = vmul.f32 %v1563, %v1649
    %v1667 = vmul.f32 %v1564, %v1653
    %v1668 = vmul.f32 %v1565, %v1657
    %v1669 = vmul.f32 %v1566, %v1661
    %v1674 = vcombine.low %v1666, %v1667
    %v1675 = vcombine.low %v1668, %v1669
    %v1677 = vunpack.c.l.s4 1966171168
    %v1678 = vunpack.c.0.s8 %v1677
    %v1679 = vlaneseq
    %v1680 = vshrl.u32 %v1679, 7
    %v1681 = vsub.s32 %v1678, %v1680
    %v1682 = vrot.slane %v1674, %v1681
    %v1684 = vunpack.c.l.s4 1966171168
    %v1685 = vunpack.c.0.s8 %v1684
    %v1686 = vlaneseq
    %v1687 = vshrl.u32 %v1686, 7
    %v1688 = vsub.s32 %v1685, %v1687
    %v1689 = vrot.slane %v1675, %v1688
    %v1690 = vcombine.low %v1682, %v1689
    %v1692 = vunpack.c.l.s4 1966171168
    %v1693 = vunpack.c.0.s8 %v1692
    %v1694 = vlaneseq
    %v1695 = vshrl.u32 %v1694, 7
    %v1696 = vsub.s32 %v1693, %v1695
    %v1697 = vrot.slane %v1690, %v1696
    %v1699 = vsub.f32 %v1644, %v1697
    %v1700 = vmul.f32 %v1535, %v1649
    %v1701 = vmul.f32 %v1536, %v1653
    %v1702 = vmul.f32 %v1537, %v1657
    %v1703 = vmul.f32 %v1538, %v1661
    %v1705 = vlaneseq
    %v1706 = vshrl.u32 %v1705, 7
    %v1707 = vsub.s32 0, %v1706
    %v1708 = vrot.slane %v1699, %v1707
    %v1709 = vlaneseq
    %v1710 = vshrl.u32 %v1709, 7
    %v1711 = vsub.s32 1, %v1710
    %v1712 = vrot.slane %v1699, %v1711
    %v1713 = vlaneseq
    %v1714 = vshrl.u32 %v1713, 7
    %v1715 = vsub.s32 2, %v1714
    %v1716 = vrot.slane %v1699, %v1715
    %v1717 = vlaneseq
    %v1718 = vshrl.u32 %v1717, 7
    %v1719 = vsub.s32 3, %v1718
    %v1720 = vrot.slane %v1699, %v1719
    %v1725 = vadd.f32 %v1700, %v1708
    %v1726 = vadd.f32 %v1701, %v1712
    %v1727 = vadd.f32 %v1702, %v1716
    %v1728 = vadd.f32 %v1703, %v1720
    %v1729 = vmax.f32 %v1725, 0.0
    %v1730 = vmax.f32 %v1726, 0.0
    %v1731 = vmax.f32 %v1727, 0.0
    %v1732 = vmax.f32 %v1728, 0.0
    %s1733 = smul.u32 2, 64
    %s1734 = smul.u32 %s1733, 2
    %s1735 = sshll.u32 %s1734, 4
    %1736 = dma.done %s77, %s1735
    %v1737 = vld [vmem:[#allocation3] sm:$0xff]
    %v1738 = vld [vmem:[#allocation3 + $0x8] sm:$0xff]
    %v1739 = vld [vmem:[#allocation3 + $0x10] sm:$0xff]
    %v1740 = vld [vmem:[#allocation3 + $0x18] sm:$0xff]
    %v1741 = vld [vmem:[#allocation3 + $0x20] sm:$0xff]
    %v1742 = vld [vmem:[#allocation3 + $0x28] sm:$0xff]
    %v1743 = vld [vmem:[#allocation3 + $0x30] sm:$0xff]
    %v1744 = vld [vmem:[#allocation3 + $0x38] sm:$0xff]
    %v1745 = vld [vmem:[#allocation3 + $0x40] sm:$0xff]
    %v1746 = vld [vmem:[#allocation3 + $0x48] sm:$0xff]
    %v1747 = vld [vmem:[#allocation3 + $0x50] sm:$0xff]
    %v1748 = vld [vmem:[#allocation3 + $0x58] sm:$0xff]
    %v1749 = vld [vmem:[#allocation3 + $0x60] sm:$0xff]
    %v1750 = vld [vmem:[#allocation3 + $0x68] sm:$0xff]
    %v1751 = vld [vmem:[#allocation3 + $0x70] sm:$0xff]
    %v1752 = vld [vmem:[#allocation3 + $0x78] sm:$0xff]
    %v1753 = vld [vmem:[#allocation3 + $0x80] sm:$0xff]
    %v1754 = vld [vmem:[#allocation3 + $0x88] sm:$0xff]
    %v1755 = vld [vmem:[#allocation3 + $0x90] sm:$0xff]
    %v1756 = vld [vmem:[#allocation3 + $0x98] sm:$0xff]
    %v1757 = vld [vmem:[#allocation3 + $0xa0] sm:$0xff]
    %v1758 = vld [vmem:[#allocation3 + $0xa8] sm:$0xff]
    %v1759 = vld [vmem:[#allocation3 + $0xb0] sm:$0xff]
    %v1760 = vld [vmem:[#allocation3 + $0xb8] sm:$0xff]
    %v1761 = vld [vmem:[#allocation3 + $0xc0] sm:$0xff]
    %v1762 = vld [vmem:[#allocation3 + $0xc8] sm:$0xff]
    %v1763 = vld [vmem:[#allocation3 + $0xd0] sm:$0xff]
    %v1764 = vld [vmem:[#allocation3 + $0xd8] sm:$0xff]
    %v1765 = vld [vmem:[#allocation3 + $0xe0] sm:$0xff]
    %v1766 = vld [vmem:[#allocation3 + $0xe8] sm:$0xff]
    %v1767 = vld [vmem:[#allocation3 + $0xf0] sm:$0xff]
    %v1768 = vld [vmem:[#allocation3 + $0xf8] sm:$0xff]
    %v1769 = vpack.c.bf16 %v1729, %v1729
    %v1770 = vpack.c.bf16 %v1730, %v1730
    %v1771 = vpack.c.bf16 %v1731, %v1731
    %v1772 = vpack.c.bf16 %v1732, %v1732
    %v1773 = vunpack.c.l.s8.bf16 %v1737
    %v1774 = vunpack.c.l.s8.bf16 %v1738
    %v1775 = vunpack.c.h.s8.bf16 %v1737
    %v1776 = vunpack.c.h.s8.bf16 %v1738
    %v1777 = vunpack.c.l.s8.bf16 %v1739
    %v1778 = vunpack.c.l.s8.bf16 %v1740
    %v1779 = vunpack.c.h.s8.bf16 %v1739
    %v1780 = vunpack.c.h.s8.bf16 %v1740
    %v1781 = vunpack.c.l.s8.bf16 %v1741
    %v1782 = vunpack.c.l.s8.bf16 %v1742
    %v1783 = vunpack.c.h.s8.bf16 %v1741
    %v1784 = vunpack.c.h.s8.bf16 %v1742
    %v1785 = vunpack.c.l.s8.bf16 %v1743
    %v1786 = vunpack.c.l.s8.bf16 %v1744
    %v1787 = vunpack.c.h.s8.bf16 %v1743
    %v1788 = vunpack.c.h.s8.bf16 %v1744
    %v1789 = vunpack.c.l.s8.bf16 %v1745
    %v1790 = vunpack.c.l.s8.bf16 %v1746
    %v1791 = vunpack.c.h.s8.bf16 %v1745
    %v1792 = vunpack.c.h.s8.bf16 %v1746
    %v1793 = vunpack.c.l.s8.bf16 %v1747
    %v1794 = vunpack.c.l.s8.bf16 %v1748
    %v1795 = vunpack.c.h.s8.bf16 %v1747
    %v1796 = vunpack.c.h.s8.bf16 %v1748
    %v1797 = vunpack.c.l.s8.bf16 %v1749
    %v1798 = vunpack.c.l.s8.bf16 %v1750
    %v1799 = vunpack.c.h.s8.bf16 %v1749
    %v1800 = vunpack.c.h.s8.bf16 %v1750
    %v1801 = vunpack.c.l.s8.bf16 %v1751
    %v1802 = vunpack.c.l.s8.bf16 %v1752
    %v1803 = vunpack.c.h.s8.bf16 %v1751
    %v1804 = vunpack.c.h.s8.bf16 %v1752
    %v1805 = vunpack.c.l.s8.bf16 %v1753
    %v1806 = vunpack.c.l.s8.bf16 %v1754
    %v1807 = vunpack.c.h.s8.bf16 %v1753
    %v1808 = vunpack.c.h.s8.bf16 %v1754
    %v1809 = vunpack.c.l.s8.bf16 %v1755
    %v1810 = vunpack.c.l.s8.bf16 %v1756
    %v1811 = vunpack.c.h.s8.bf16 %v1755
    %v1812 = vunpack.c.h.s8.bf16 %v1756
    %v1813 = vunpack.c.l.s8.bf16 %v1757
    %v1814 = vunpack.c.l.s8.bf16 %v1758
    %v1815 = vunpack.c.h.s8.bf16 %v1757
    %v1816 = vunpack.c.h.s8.bf16 %v1758
    %v1817 = vunpack.c.l.s8.bf16 %v1759
    %v1818 = vunpack.c.l.s8.bf16 %v1760
    %v1819 = vunpack.c.h.s8.bf16 %v1759
    %v1820 = vunpack.c.h.s8.bf16 %v1760
    %v1821 = vunpack.c.l.s8.bf16 %v1761
    %v1822 = vunpack.c.l.s8.bf16 %v1762
    %v1823 = vunpack.c.h.s8.bf16 %v1761
    %v1824 = vunpack.c.h.s8.bf16 %v1762
    %v1825 = vunpack.c.l.s8.bf16 %v1763
    %v1826 = vunpack.c.l.s8.bf16 %v1764
    %v1827 = vunpack.c.h.s8.bf16 %v1763
    %v1828 = vunpack.c.h.s8.bf16 %v1764
    %v1829 = vunpack.c.l.s8.bf16 %v1765
    %v1830 = vunpack.c.l.s8.bf16 %v1766
    %v1831 = vunpack.c.h.s8.bf16 %v1765
    %v1832 = vunpack.c.h.s8.bf16 %v1766
    %v1833 = vunpack.c.l.s8.bf16 %v1767
    %v1834 = vunpack.c.l.s8.bf16 %v1768
    %v1835 = vunpack.c.h.s8.bf16 %v1767
    %v1836 = vunpack.c.h.s8.bf16 %v1768
    %1837 = vmatprep.subr.bf16.mxu0 %v1774
    %1838 = vmatpush1.bf16.msra.mxu0 %v1773
    %1839 = vmatprep.subr.bf16.mxu0 %v1776
    %1840 = vmatpush1.bf16.msra.mxu0 %v1775
    %1841 = vmatprep.subr.bf16.mxu0 %v1778
    %1842 = vmatpush1.bf16.msra.mxu0 %v1777
    %1843 = vmatprep.subr.bf16.mxu0 %v1780
    %1844 = vmatpush1.bf16.msra.mxu0 %v1779
    %1845 = vmatprep.subr.bf16.mxu0 %v1782
    %1846 = vmatpush1.bf16.msra.mxu0 %v1781
    %1847 = vmatprep.subr.bf16.mxu0 %v1784
    %1848 = vmatpush1.bf16.msra.mxu0 %v1783
    %1849 = vmatprep.subr.bf16.mxu0 %v1786
    %1850 = vmatpush1.bf16.msra.mxu0 %v1785
    %1851 = vmatprep.subr.bf16.mxu0 %v1788
    %1852 = vmatpush1.bf16.msra.mxu0 %v1787
    %1853 = vmatprep.subr.bf16.mxu0 %v1790
    %1854 = vmatpush1.bf16.msra.mxu0 %v1789
    %1855 = vmatprep.subr.bf16.mxu0 %v1792
    %1856 = vmatpush1.bf16.msra.mxu0 %v1791
    %1857 = vmatprep.subr.bf16.mxu0 %v1794
    %1858 = vmatpush1.bf16.msra.mxu0 %v1793
    %1859 = vmatprep.subr.bf16.mxu0 %v1796
    %1860 = vmatpush1.bf16.msra.mxu0 %v1795
    %1861 = vmatprep.subr.bf16.mxu0 %v1798
    %1862 = vmatpush1.bf16.msra.mxu0 %v1797
    %1863 = vmatprep.subr.bf16.mxu0 %v1800
    %1864 = vmatpush1.bf16.msra.mxu0 %v1799
    %1865 = vmatprep.subr.bf16.mxu0 %v1802
    %1866 = vmatpush1.bf16.msra.mxu0 %v1801
    %1867 = vmatprep.subr.bf16.mxu0 %v1804
    %1868 = vmatpush1.bf16.msra.mxu0 %v1803
    %1869 = vmatprep.mubr.bf16.mxu0 %v1770
    %1870 = vmatmul.mubr.bf16.gmra.mrb[0].mxu0 %v1769
    %v1871 = vpop.f32.mrb[0].mxu0
    %v1872 = vadd.f32 0.0, %v1871
    %v1873 = vpop.f32.mrb[0].mxu0
    %v1874 = vadd.f32 0.0, %v1873
    %v1875 = vpop.f32.mrb[0].mxu0
    %v1876 = vpop.f32.mrb[0].mxu0
    %1877 = vdwg.mxu0
    %1878 = vmatprep.subr.bf16.mxu0 %v1806
    %1879 = vmatpush1.bf16.msra.mxu0 %v1805
    %1880 = vmatprep.subr.bf16.mxu0 %v1808
    %1881 = vmatpush1.bf16.msra.mxu0 %v1807
    %1882 = vmatprep.subr.bf16.mxu0 %v1810
    %1883 = vmatpush1.bf16.msra.mxu0 %v1809
    %1884 = vmatprep.subr.bf16.mxu0 %v1812
    %1885 = vmatpush1.bf16.msra.mxu0 %v1811
    %1886 = vmatprep.subr.bf16.mxu0 %v1814
    %1887 = vmatpush1.bf16.msra.mxu0 %v1813
    %1888 = vmatprep.subr.bf16.mxu0 %v1816
    %1889 = vmatpush1.bf16.msra.mxu0 %v1815
    %1890 = vmatprep.subr.bf16.mxu0 %v1818
    %1891 = vmatpush1.bf16.msra.mxu0 %v1817
    %1892 = vmatprep.subr.bf16.mxu0 %v1820
    %1893 = vmatpush1.bf16.msra.mxu0 %v1819
    %1894 = vmatprep.subr.bf16.mxu0 %v1822
    %1895 = vmatpush1.bf16.msra.mxu0 %v1821
    %1896 = vmatprep.subr.bf16.mxu0 %v1824
    %1897 = vmatpush1.bf16.msra.mxu0 %v1823
    %1898 = vmatprep.subr.bf16.mxu0 %v1826
    %1899 = vmatpush1.bf16.msra.mxu0 %v1825
    %1900 = vmatprep.subr.bf16.mxu0 %v1828
    %1901 = vmatpush1.bf16.msra.mxu0 %v1827
    %1902 = vmatprep.subr.bf16.mxu0 %v1830
    %1903 = vmatpush1.bf16.msra.mxu0 %v1829
    %1904 = vmatprep.subr.bf16.mxu0 %v1832
    %1905 = vmatpush1.bf16.msra.mxu0 %v1831
    %1906 = vmatprep.subr.bf16.mxu0 %v1834
    %1907 = vmatpush1.bf16.msra.mxu0 %v1833
    %1908 = vmatprep.subr.bf16.mxu0 %v1836
    %1909 = vmatpush1.bf16.msra.mxu0 %v1835
    %1910 = vmatprep.mubr.bf16.mxu0 %v1772
    %1911 = vmatmul.mubr.bf16.gmra.mrb[0].mxu0 %v1771
    %v1912 = vpop.f32.mrb[0].mxu0
    %v1913 = vadd.f32 %v1872, %v1912
    %v1914 = vpop.f32.mrb[0].mxu0
    %v1915 = vadd.f32 %v1874, %v1914
    %v1916 = vpop.f32.mrb[0].mxu0
    %v1917 = vpop.f32.mrb[0].mxu0
    %1918 = vdwg.mxu0
    %s1919 = scalar_lea.vmem [#allocation8], 69
    %v1920 = vld [vmem:[%s1919] ss:$8 sm:$0x3]
    %v1922 = vlaneseq
    %v1923 = vshrl.u32 %v1922, 7
    %v1924 = vsub.s32 0, %v1923
    %v1925 = vrot.slane %v1920, %v1924
    %v1926 = vlaneseq
    %v1927 = vshrl.u32 %v1926, 7
    %v1928 = vsub.s32 1, %v1927
    %v1929 = vrot.slane %v1920, %v1928
    %v1932 = vmul.f32 %v1913, %v1925
    %v1933 = vmul.f32 %v1915, %v1929
    %v1934 = vrot.slane %v1932, 4
    %v1935 = vadd.f32 %v1932, %v1934
    %v1936 = vrot.slane %v1935, 2
    %v1937 = vadd.f32 %v1935, %v1936
    %v1938 = vrot.slane %v1937, 1
    %v1939 = vadd.f32 %v1937, %v1938
    %v1940 = vrot.slane %v1933, 4
    %v1941 = vadd.f32 %v1933, %v1940
    %v1942 = vrot.slane %v1941, 2
    %v1943 = vadd.f32 %v1941, %v1942
    %v1944 = vrot.slane %v1943, 1
    %v1945 = vadd.f32 %v1943, %v1944
    %v1946 = vmul.f32 %v1939, %v452
    %v1947 = vmul.f32 %v1945, %v452
    %v1948 = vsub.f32 %v1932, %v1946
    %v1949 = vsub.f32 %v1933, %v1947
    %v1950 = vmul.f32 %v1948, %v1948
    %v1951 = vmul.f32 %v1949, %v1949
    %v1952 = vrot.slane %v1950, 4
    %v1953 = vadd.f32 %v1950, %v1952
    %v1954 = vrot.slane %v1953, 2
    %v1955 = vadd.f32 %v1953, %v1954
    %v1956 = vrot.slane %v1955, 1
    %v1957 = vadd.f32 %v1955, %v1956
    %v1958 = vrot.slane %v1951, 4
    %v1959 = vadd.f32 %v1951, %v1958
    %v1960 = vrot.slane %v1959, 2
    %v1961 = vadd.f32 %v1959, %v1960
    %v1962 = vrot.slane %v1961, 1
    %v1963 = vadd.f32 %v1961, %v1962
    %v1964 = vmul.f32 %v1957, %v452
    %v1965 = vmul.f32 %v1963, %v452
    %s1966 = scalar_lea.vmem [#allocation8], 4
    %v1967 = vld [vmem:[%s1966] ss:$8 sm:$0x3]
    %v1968 = vadd.f32 %v1964, 1e-05
    %v1969 = vadd.f32 %v1965, 1e-05
    %v1970 = vrsqrt.pop %v1968
    %v1971 = vrsqrt.pop %v1969
    %v1974 = vcombine.low %v1970, %v1971
    %v1976 = vunpack.c.l.s4 1966171168
    %v1977 = vunpack.c.0.s8 %v1976
    %v1978 = vlaneseq
    %v1979 = vshrl.u32 %v1978, 7
    %v1980 = vsub.s32 %v1977, %v1979
    %v1981 = vrot.slane %v1974, %v1980
    %v1983 = vunpack.c.l.s4 1966171168
    %v1984 = vunpack.c.0.s8 %v1983
    %v1985 = vlaneseq
    %v1986 = vshrl.u32 %v1985, 7
    %v1987 = vsub.s32 %v1984, %v1986
    %v1988 = vrot.slane %v1981, %v1987
    %v1990 = vmul.f32 %v1967, %v1988
    %s1991 = scalar_lea.vmem [#allocation8], 5
    %v1992 = vld [vmem:[%s1991] ss:$8 sm:$0x3]
    %v1994 = vlaneseq
    %v1995 = vshrl.u32 %v1994, 7
    %v1996 = vsub.s32 0, %v1995
    %v1997 = vrot.slane %v1990, %v1996
    %v1998 = vlaneseq
    %v1999 = vshrl.u32 %v1998, 7
    %v2000 = vsub.s32 1, %v1999
    %v2001 = vrot.slane %v1990, %v2000
    %v2004 = vmul.f32 %v1946, %v1997
    %v2005 = vmul.f32 %v1947, %v2001
    %v2008 = vcombine.low %v2004, %v2005
    %v2010 = vunpack.c.l.s4 1966171168
    %v2011 = vunpack.c.0.s8 %v2010
    %v2012 = vlaneseq
    %v2013 = vshrl.u32 %v2012, 7
    %v2014 = vsub.s32 %v2011, %v2013
    %v2015 = vrot.slane %v2008, %v2014
    %v2017 = vunpack.c.l.s4 1966171168
    %v2018 = vunpack.c.0.s8 %v2017
    %v2019 = vlaneseq
    %v2020 = vshrl.u32 %v2019, 7
    %v2021 = vsub.s32 %v2018, %v2020
    %v2022 = vrot.slane %v2015, %v2021
    %v2024 = vsub.f32 %v1992, %v2022
    %v2025 = vmul.f32 %v1932, %v1997
    %v2026 = vmul.f32 %v1933, %v2001
    %v2028 = vlaneseq
    %v2029 = vshrl.u32 %v2028, 7
    %v2030 = vsub.s32 0, %v2029
    %v2031 = vrot.slane %v2024, %v2030
    %v2032 = vlaneseq
    %v2033 = vshrl.u32 %v2032, 7
    %v2034 = vsub.s32 1, %v2033
    %v2035 = vrot.slane %v2024, %v2034
    %v2038 = vadd.f32 %v2025, %v2031
    %v2039 = vadd.f32 %v2026, %v2035
    %v2040 = vmax.f32 %v2038, 0.0
    %v2041 = vmax.f32 %v2039, 0.0
    %v2042 = vld [vmem:[%s5] sm:$0xff]
    %v2043 = vld [vmem:[%s5 + $0x8] sm:$0xff]
    %v2044 = vld [vmem:[%s5 + $0x10] sm:$0xff]
    %v2045 = vld [vmem:[%s5 + $0x18] sm:$0xff]
    %v2046 = vld [vmem:[%s5 + $0x20] sm:$0xff]
    %v2047 = vld [vmem:[%s5 + $0x28] sm:$0xff]
    %v2048 = vld [vmem:[%s5 + $0x30] sm:$0xff]
    %v2049 = vld [vmem:[%s5 + $0x38] sm:$0xff]
    %v2050 = vpack.c.bf16 %v2040, %v2040
    %v2051 = vpack.c.bf16 %v2041, %v2041
    %v2052 = vunpack.c.l.s8.bf16 %v2042
    %v2053 = vunpack.c.h.s8.bf16 %v2042
    %v2054 = vunpack.c.l.s8.bf16 %v2043
    %v2055 = vunpack.c.h.s8.bf16 %v2043
    %v2056 = vunpack.c.l.s8.bf16 %v2044
    %v2057 = vunpack.c.h.s8.bf16 %v2044
    %v2058 = vunpack.c.l.s8.bf16 %v2045
    %v2059 = vunpack.c.h.s8.bf16 %v2045
    %v2060 = vunpack.c.l.s8.bf16 %v2046
    %v2061 = vunpack.c.h.s8.bf16 %v2046
    %v2062 = vunpack.c.l.s8.bf16 %v2047
    %v2063 = vunpack.c.h.s8.bf16 %v2047
    %v2064 = vunpack.c.l.s8.bf16 %v2048
    %v2065 = vunpack.c.h.s8.bf16 %v2048
    %v2066 = vunpack.c.l.s8.bf16 %v2049
    %v2067 = vunpack.c.h.s8.bf16 %v2049
    %2068 = vmatprep.subr.bf16.mxu0 0
    %2069 = vmatpush1.bf16.msra.mxu0 %v2052
    %2070 = vmatprep.subr.bf16.mxu0 0
    %2071 = vmatpush1.bf16.msra.mxu0 %v2053
    %2072 = vmatprep.subr.bf16.mxu0 0
    %2073 = vmatpush1.bf16.msra.mxu0 %v2054
    %2074 = vmatprep.subr.bf16.mxu0 0
    %2075 = vmatpush1.bf16.msra.mxu0 %v2055
    %2076 = vmatprep.subr.bf16.mxu0 0
    %2077 = vmatpush1.bf16.msra.mxu0 %v2056
    %2078 = vmatprep.subr.bf16.mxu0 0
    %2079 = vmatpush1.bf16.msra.mxu0 %v2057
    %2080 = vmatprep.subr.bf16.mxu0 0
    %2081 = vmatpush1.bf16.msra.mxu0 %v2058
    %2082 = vmatprep.subr.bf16.mxu0 0
    %2083 = vmatpush1.bf16.msra.mxu0 %v2059
    %2084 = vmatprep.subr.bf16.mxu0 0
    %2085 = vmatpush1.bf16.msra.mxu0 %v2060
    %2086 = vmatprep.subr.bf16.mxu0 0
    %2087 = vmatpush1.bf16.msra.mxu0 %v2061
    %2088 = vmatprep.subr.bf16.mxu0 0
    %2089 = vmatpush1.bf16.msra.mxu0 %v2062
    %2090 = vmatprep.subr.bf16.mxu0 0
    %2091 = vmatpush1.bf16.msra.mxu0 %v2063
    %2092 = vmatprep.subr.bf16.mxu0 0
    %2093 = vmatpush1.bf16.msra.mxu0 %v2064
    %2094 = vmatprep.subr.bf16.mxu0 0
    %2095 = vmatpush1.bf16.msra.mxu0 %v2065
    %2096 = vmatprep.subr.bf16.mxu0 0
    %2097 = vmatpush1.bf16.msra.mxu0 %v2066
    %2098 = vmatprep.subr.bf16.mxu0 0
    %2099 = vmatpush1.bf16.msra.mxu0 %v2067
    %2100 = vmatprep.mubr.bf16.mxu0 %v2051
    %2101 = vmatmul.mubr.bf16.gmra.mrb[0].mxu0 %v2050
    %v2102 = vpop.f32.mrb[0].mxu0
    %v2103 = vadd.f32 0.0, %v2102
    %v2104 = vpop.f32.mrb[0].mxu0
    %v2105 = vpop.f32.mrb[0].mxu0
    %v2106 = vpop.f32.mrb[0].mxu0
    %2107 = vdwg.mxu0
    %v2108 = vld [vmem:[#allocation8 + $0x46] ss:$0 sm:$0xff]
    %v2109 = vmul.f32 %v2103, %v2108
    %v2110 = vrot.slane %v2109, 4
    %v2111 = vadd.f32 %v2109, %v2110
    %v2112 = vrot.slane %v2111, 2
    %v2113 = vadd.f32 %v2111, %v2112
    %v2114 = vrot.slane %v2113, 1
    %v2115 = vadd.f32 %v2113, %v2114
    %v2116 = vmul.f32 %v2115, %v452
    %v2117 = vsub.f32 %v2109, %v2116
    %v2118 = vmul.f32 %v2117, %v2117
    %v2119 = vrot.slane %v2118, 4
    %v2120 = vadd.f32 %v2118, %v2119
    %v2121 = vrot.slane %v2120, 2
    %v2122 = vadd.f32 %v2120, %v2121
    %v2123 = vrot.slane %v2122, 1
    %v2124 = vadd.f32 %v2122, %v2123
    %v2125 = vmul.f32 %v2124, %v452
    %v2126 = vld [vmem:[#allocation8 + $0x6] ss:$0 sm:$0xff]
    %v2127 = vadd.f32 %v2125, 1e-05
    %v2128 = vrsqrt.pop %v2127
    %v2129 = vmul.f32 %v2126, %v2128
    %v2130 = vld [vmem:[#allocation8 + $0x7] ss:$0 sm:$0xff]
    %v2131 = vmul.f32 %v2116, %v2129
    %v2132 = vsub.f32 %v2130, %v2131
    %v2133 = vmul.f32 %v2109, %v2129
    %v2134 = vadd.f32 %v2133, %v2132
    %v2135 = vmax.f32 %v2134, 0.0
    %v2136 = vld [vmem:[%s6] sm:$0xff]
    %v2137 = vld [vmem:[%s6 + $0x8] sm:$0xff]
    %v2138 = vld [vmem:[%s6 + $0x10] sm:$0xff]
    %v2139 = vld [vmem:[%s6 + $0x18] sm:$0xff]
    %v2140 = vpack.c.bf16 %v2135, %v2135
    %v2141 = vunpack.c.l.s8.bf16 %v2136
    %v2142 = vunpack.c.h.s8.bf16 %v2136
    %v2143 = vunpack.c.l.s8.bf16 %v2137
    %v2144 = vunpack.c.h.s8.bf16 %v2137
    %v2145 = vunpack.c.l.s8.bf16 %v2138
    %v2146 = vunpack.c.h.s8.bf16 %v2138
    %v2147 = vunpack.c.l.s8.bf16 %v2139
    %v2148 = vunpack.c.h.s8.bf16 %v2139
    %2149 = vmatprep.subr.bf16.mxu0 0
    %2150 = vmatpush1.bf16.msra.mxu0 %v2141
    %2151 = vmatprep.subr.bf16.mxu0 0
    %2152 = vmatpush1.bf16.msra.mxu0 %v2142
    %2153 = vmatprep.subr.bf16.mxu0 0
    %2154 = vmatpush1.bf16.msra.mxu0 %v2143
    %2155 = vmatprep.subr.bf16.mxu0 0
    %2156 = vmatpush1.bf16.msra.mxu0 %v2144
    %2157 = vmatprep.subr.bf16.mxu0 0
    %2158 = vmatpush1.bf16.msra.mxu0 %v2145
    %2159 = vmatprep.subr.bf16.mxu0 0
    %2160 = vmatpush1.bf16.msra.mxu0 %v2146
    %2161 = vmatprep.subr.bf16.mxu0 0
    %2162 = vmatpush1.bf16.msra.mxu0 %v2147
    %2163 = vmatprep.subr.bf16.mxu0 0
    %2164 = vmatpush1.bf16.msra.mxu0 %v2148
    %2165 = vmatprep.subr.bf16.mxu0 0
    %2166 = vmatpush1.bf16.msra.mxu0 0
    %2167 = vmatprep.subr.bf16.mxu0 0
    %2168 = vmatpush1.bf16.msra.mxu0 0
    %2169 = vmatprep.subr.bf16.mxu0 0
    %2170 = vmatpush1.bf16.msra.mxu0 0
    %2171 = vmatprep.subr.bf16.mxu0 0
    %2172 = vmatpush1.bf16.msra.mxu0 0
    %2173 = vmatprep.subr.bf16.mxu0 0
    %2174 = vmatpush1.bf16.msra.mxu0 0
    %2175 = vmatprep.subr.bf16.mxu0 0
    %2176 = vmatpush1.bf16.msra.mxu0 0
    %2177 = vmatprep.subr.bf16.mxu0 0
    %2178 = vmatpush1.bf16.msra.mxu0 0
    %2179 = vmatprep.subr.bf16.mxu0 0
    %2180 = vmatpush1.bf16.msra.mxu0 0
    %2181 = vmatprep.mubr.bf16.mxu0 0
    %2182 = vmatmul.mubr.bf16.gmra.mrb[0].mxu0 %v2140
    %v2183 = vpop.f32.mrb[0].mxu0
    %v2184 = vadd.f32 0.0, %v2183
    %v2185 = vpop.f32.mrb[0].mxu0
    %v2186 = vpop.f32.mrb[0].mxu0
    %v2187 = vpop.f32.mrb[0].mxu0
    %2188 = vdwg.mxu0
    %v2189 = vld [vmem:[#allocation8 + $0x47] ss:$0 sm:$0xff]
    %v2190 = vmul.f32 %v2184, %v2189
    %vm2191 = vcmask 523264
    %v2192 = vsel %vm2191, %v2190, 0.0
    %v2193 = vrot.slane %v2192, 4
    %v2194 = vadd.f32 %v2192, %v2193
    %v2195 = vrot.slane %v2194, 2
    %v2196 = vadd.f32 %v2194, %v2195
    %v2197 = vrot.slane %v2196, 1
    %v2198 = vadd.f32 %v2196, %v2197
    %v2199 = vmul.f32 %v2198, %v452
    %v2200 = vsub.f32 %v2190, %v2199
    %v2201 = vmul.f32 %v2200, %v2200
    %v2202 = vsel %vm2191, %v2201, 0.0
    %v2203 = vrot.slane %v2202, 4
    %v2204 = vadd.f32 %v2202, %v2203
    %v2205 = vrot.slane %v2204, 2
    %v2206 = vadd.f32 %v2204, %v2205
    %v2207 = vrot.slane %v2206, 1
    %v2208 = vadd.f32 %v2206, %v2207
    %v2209 = vmul.f32 %v2208, %v452
    %v2210 = vld [vmem:[#allocation8 + $0x40] ss:$0 sm:$0xff]
    %v2211 = vadd.f32 %v2209, 1e-05
    %v2212 = vrsqrt.pop %v2211
    %v2213 = vmul.f32 %v2210, %v2212
    %v2214 = vld [vmem:[#allocation8 + $0x41] ss:$0 sm:$0xff]
    %v2215 = vmul.f32 %v2199, %v2213
    %v2216 = vsub.f32 %v2214, %v2215
    %v2217 = vmul.f32 %v2190, %v2213
    %v2218 = vadd.f32 %v2217, %v2216
    %v2219 = vmax.f32 %v2218, 0.0
    %v2220 = vld [vmem:[%s7] sm:$0xff]
    %v2221 = vld [vmem:[%s7 + $0x8] sm:$0xff]
    %v2222 = vpack.c.bf16 %v2219, %v2219
    %v2223 = vunpack.c.l.s8.bf16 %v2220
    %v2224 = vunpack.c.h.s8.bf16 %v2220
    %v2225 = vunpack.c.l.s8.bf16 %v2221
    %v2226 = vunpack.c.h.s8.bf16 %v2221
    %v2228 = vsel %vm2191, %v2222, 0
    %2230 = vmatprep.subr.bf16.mxu0 0
    %2231 = vmatpush1.bf16.msra.mxu0 %v2223
    %2232 = vmatprep.subr.bf16.mxu0 0
    %2233 = vmatpush1.bf16.msra.mxu0 %v2224
    %2234 = vmatprep.subr.bf16.mxu0 0
    %2235 = vmatpush1.bf16.msra.mxu0 %v2225
    %2236 = vmatprep.subr.bf16.mxu0 0
    %2237 = vmatpush1.bf16.msra.mxu0 %v2226
    %2238 = vmatprep.subr.bf16.mxu0 0
    %2239 = vmatpush1.bf16.msra.mxu0 0
    %2240 = vmatprep.subr.bf16.mxu0 0
    %2241 = vmatpush1.bf16.msra.mxu0 0
    %2242 = vmatprep.subr.bf16.mxu0 0
    %2243 = vmatpush1.bf16.msra.mxu0 0
    %2244 = vmatprep.subr.bf16.mxu0 0
    %2245 = vmatpush1.bf16.msra.mxu0 0
    %2246 = vmatprep.subr.bf16.mxu0 0
    %2247 = vmatpush1.bf16.msra.mxu0 0
    %2248 = vmatprep.subr.bf16.mxu0 0
    %2249 = vmatpush1.bf16.msra.mxu0 0
    %2250 = vmatprep.subr.bf16.mxu0 0
    %2251 = vmatpush1.bf16.msra.mxu0 0
    %2252 = vmatprep.subr.bf16.mxu0 0
    %2253 = vmatpush1.bf16.msra.mxu0 0
    %2254 = vmatprep.subr.bf16.mxu0 0
    %2255 = vmatpush1.bf16.msra.mxu0 0
    %2256 = vmatprep.subr.bf16.mxu0 0
    %2257 = vmatpush1.bf16.msra.mxu0 0
    %2258 = vmatprep.subr.bf16.mxu0 0
    %2259 = vmatpush1.bf16.msra.mxu0 0
    %2260 = vmatprep.subr.bf16.mxu0 0
    %2261 = vmatpush1.bf16.msra.mxu0 0
    %2262 = vmatprep.mubr.bf16.mxu0 0
    %2263 = vmatmul.mubr.bf16.gmra.mrb[0].mxu0 %v2228
    %v2264 = vpop.f32.mrb[0].mxu0
    %v2265 = vadd.f32 0.0, %v2264
    %v2266 = vpop.f32.mrb[0].mxu0
    %v2267 = vpop.f32.mrb[0].mxu0
    %v2268 = vpop.f32.mrb[0].mxu0
    %2269 = vdwg.mxu0
    %v2270 = vld [vmem:[#allocation8 + $0x80] ss:$0 sm:$0xff]
    %v2271 = vmul.f32 %v2265, %v2270
    %v2272 = vld [vmem:[#allocation8 + $0x42] ss:$0 sm:$0xff]
    %v2273 = vadd.f32 %v2271, %v2272
    %v2274 = vmax.f32 %v2273, 0.0
    %vm2275 = vcmask 130048
    %v2276 = vsel %vm2275, %v2274, -inf
    %2277 = vmax.xlane.f32.xlu0 %v2276
    %v2278 = vpop.xlane.xlu0 %2277
    %v2279 = vsub.f32 %v2274, %v2278
    %v2280 = vmul.f32 %v2279, 1.442695
    %v2281 = vpow.pop %v2280
    %v2282 = vsel %vm2275, %v2281, 0.0
    %2283 = vadd.xlane.f32.xlu0 %v2282
    %v2284 = vpop.xlane.xlu0 %2283
    %v2285 = vrcp.pop %v2284
    %v2286 = vmul.f32 %v2281, %v2285
    %2287 = vst.msk [vmem:[#allocation11] sm:$0xff] %vm2275, %v2286
    // Predicated region
    $region46: #{neural_net_forward.1} parent=1 // pred_check
      _
    $region47: #{neural_net_forward.1} parent=1 // pred_check_branch
      %2289 = sbr.rel (0) target = $region49
    $region48: #{neural_net_forward.1} parent=1 // pred_region
      %s2291 = ssub.s32 128, 128
      %2292 = vsyncadd [#allocation7], %s2291
      %s2294 = sshll.u32 [#allocation11], 4
      %s2295 = int_to_ptr.vmem [resolvable:$true] %s2294
      %2297 = dma.vmem_to_hbm [thread:$0]  %s2295, 128, %s8, [#allocation7]
    $region49: #{neural_net_forward.1} parent=1 // pred_fallthru
      _
    // Predicated region
    $region50: #{neural_net_forward.1} parent=1 // pred_check
      _
    $region51: #{neural_net_forward.1} parent=1 // pred_check_branch
      %2299 = sbr.rel (0) target = $region53
    $region52: #{neural_net_forward.1} parent=1 // pred_region
      %2300 = dma.done [#allocation7], 128
    $region53: #{neural_net_forward.1} parent=1 // pred_fallthru
      _
    %2301 = vsyncpa [#allocation6], 1
    %2302 = vsyncpa [#allocation9], 1
    %2303 = vsyncpa [#allocation7], 1
  %2304 = vsyncmov [#allocation4]
  %s2305 = vpop.sfrf %2304
  %p2306 = scmp.eq.s32.totalorder %s2305, 0
  %p2307 = pneg %p2306
  %2309 = shalt.err (%p2307)
  %s2310 = scalar_lea.sflag [#allocation4], 1
  %2311 = vsyncmov %s2310
  %s2312 = vpop.sfrf %2311
  %p2313 = scmp.eq.s32.totalorder %s2312, 0
  %p2314 = pneg %p2313
  %2316 = shalt.err (%p2314)

</llo_original>
